<compile_context>
chip_gen: v7x
topology: tpu7x:2x2x1
jax: 0.10.0
libtpu: 0.0.40
codegen_flags: <defaults>
</compile_context>

<pallas_src>
import functools

import numpy as np
import jax
import jax.numpy as jnp
from jax.experimental import pallas as pl
from jax.experimental.pallas import tpu as pltpu

EPS = 1e-5  # PyTorch LayerNorm default eps


# ----------------------------- kernel helpers ------------------------------
def _layernorm(x, g, b):
    mu = jnp.mean(x, axis=-1, keepdims=True)
    var = jnp.mean((x - mu) ** 2, axis=-1, keepdims=True)   # biased var (PyTorch)
    return (x - mu) * jax.lax.rsqrt(var + EPS) * g + b


def _silu(x):
    return x * jax.nn.sigmoid(x)


# --------------------------------- kernel ----------------------------------
def _mlp_decoder_kernel(x_ref,        # (B, in_dim)            input (C_in == 1 squeezed)
                        norm_ref,     # (4, in_dim)             [g0, be0, g1, be1]
                        w0_ref,       # (C_out, 1)              conv1d(k=1) weight
                        b0_ref,       # (C_out, 1)              conv1d bias
                        w1s_ref,      # (in_dim+1, hidden)      fc1 weight^T with bias row
                        w2s_ref,      # (in_dim+1, hidden)      fc2 weight^T with bias row
                        w3s_ref,      # (hidden+1, out_pad)     fc3 weight^T (lane-padded) with bias row
                        o_ref,        # (B*C_out, out_pad)
                        *, batch, in_dim, hidden):
    g0, be0 = norm_ref[0:1, :], norm_ref[1:2, :]
    g1, be1 = norm_ref[2:3, :], norm_ref[3:4, :]

    x = x_ref[...]                                           # (B, in_dim)
    xn0 = _layernorm(x, g0, be0)

    # branch 0: 1x1 conv (C_in == 1) as a VPU broadcast mul-add per batch row,
    # building the batch-folded (B*C_out, in_dim) activation directly.
    w0c = w0_ref[...]                                        # (C_out, 1)
    b0c = b0_ref[...]                                        # (C_out, 1)
    h_rows = []
    for b in range(batch):                                   # tiny static unroll
        conv_b = xn0[b:b + 1, :] * w0c + b0c                 # (C_out, in_dim)
        h_rows.append(x[b:b + 1, :] + _silu(conv_b))         # residual broadcast
    h = jnp.concatenate(h_rows, axis=0)                      # (B*C_out, in_dim)

    # branch 1 + trunk, all batches fused into one set of MXU matmuls.
    hn = _layernorm(h, g1, be1)

    w1, b1 = w1s_ref[0:in_dim, :], w1s_ref[in_dim:in_dim + 1, :]
    w2, b2 = w2s_ref[0:in_dim, :], w2s_ref[in_dim:in_dim + 1, :]
    w3, b3 = w3s_ref[0:hidden, :], w3s_ref[hidden:hidden + 1, :]

    y1 = _silu(jnp.dot(hn, w1, preferred_element_type=jnp.float32) + b1)
    y2 = jnp.dot(h, w2, preferred_element_type=jnp.float32) + b2
    out = jnp.dot(y1 + y2, w3, preferred_element_type=jnp.float32) + b3
    o_ref[...] = out.astype(o_ref.dtype)                     # lane-dense (…, 128) store


# ----------------------------- parameter packing -----------------------------
def pack_params(p, out_dim):
    """One-time repack of the 13 raw tensors into 6 lane-aligned slabs."""
    out_pad = pl.cdiv(out_dim, 128) * 128
    w3 = jnp.pad(p["w3t"], ((0, 0), (0, out_pad - out_dim)))
    b3 = jnp.pad(p["b3"], ((0, 0), (0, out_pad - out_dim)))
    return {
        "norms": jnp.concatenate([p["g0"], p["be0"], p["g1"], p["be1"]], axis=0),
        "w0": p["w0"],                                        # (C_out, 1)
        "b0": p["b0"],                                        # (C_out, 1)
        "w1s": jnp.concatenate([p["w1t"], p["b1"]], axis=0),  # (in_dim+1, hidden)
        "w2s": jnp.concatenate([p["w2t"], p["b2"]], axis=0),  # (in_dim+1, hidden)
        "w3s": jnp.concatenate([w3, b3], axis=0),             # (hidden+1, out_pad)
        "out_dim": out_dim,
    }


# -------------------------------- wrapper -----------------------------------
def mlp_decoder_pallas(x, packed):
    B, C_in, in_dim = x.shape
    # Reference semantics rely on (B, C_in, L) + (B, C_out, L) broadcasting.
    assert C_in == 1, "kernel assumes in_channels == 1 (matches the PyTorch broadcast)"
    C_out = packed["w0"].shape[0]
    hidden = packed["w1s"].shape[1]
    out_pad = packed["w3s"].shape[1]
    out_dim = packed["out_dim"]

    kernel = functools.partial(_mlp_decoder_kernel,
                               batch=B, in_dim=in_dim, hidden=hidden)

    def vmem():
        return pl.BlockSpec(memory_space=pltpu.MemorySpace.VMEM)

    # Single kernel invocation: whole batch folded into the matmul M dimension.
    # TODO(synk): for large B, add a ("parallel",) batch-tile grid axis so v7x
    # can spread tiles across its two TensorCores.
    out = pl.pallas_call(
        kernel,
        out_shape=jax.ShapeDtypeStruct((B * C_out, out_pad), jnp.float32),
        in_specs=[vmem() for _ in range(7)],
        out_specs=vmem(),
    )(x[:, 0, :], packed["norms"], packed["w0"], packed["b0"],
      packed["w1s"], packed["w2s"], packed["w3s"])

    return out.reshape(B, C_out, out_pad)[:, :, :out_dim]


# ------------------------- deterministic parameters --------------------------
def init_params(key, in_dim=256, out_dim=99, hidden_dim=512,
                in_channels=1, out_channels=20):
    ks = jax.random.split(key, 12)
    s = 0.05
    return {
        "g0":  1.0 + s * jax.random.normal(ks[0], (1, in_dim), jnp.float32),
        "be0": s * jax.random.normal(ks[1], (1, in_dim), jnp.float32),
        "w0":  s * jax.random.normal(ks[2], (out_channels, in_channels), jnp.float32),
        "b0":  s * jax.random.normal(ks[3], (out_channels, 1), jnp.float32),
        "g1":  1.0 + s * jax.random.normal(ks[4], (1, in_dim), jnp.float32),
        "be1": s * jax.random.normal(ks[5], (1, in_dim), jnp.float32),
        "w1t": s * jax.random.normal(ks[6], (in_dim, hidden_dim), jnp.float32),
        "b1":  s * jax.random.normal(ks[7], (1, hidden_dim), jnp.float32),
        "w2t": s * jax.random.normal(ks[8], (in_dim, hidden_dim), jnp.float32),
        "b2":  s * jax.random.normal(ks[9], (1, hidden_dim), jnp.float32),
        "w3t": s * jax.random.normal(ks[10], (hidden_dim, out_dim), jnp.float32),
        "b3":  s * jax.random.normal(ks[11], (1, out_dim), jnp.float32),
    }


# ----------------------------- pure-JAX reference ----------------------------
def mlp_decoder_ref(x, p):
    def ln(v, g, b):
        mu = jnp.mean(v, -1, keepdims=True)
        var = jnp.mean((v - mu) ** 2, -1, keepdims=True)
        return (v - mu) / jnp.sqrt(var + EPS) * g + b

    silu = lambda v: v * jax.nn.sigmoid(v)
    xn = ln(x, p["g0"][0], p["be0"][0])
    conv = jnp.einsum("oc,bcl->bol", p["w0"], xn) + p["b0"][None, :, :]
    h = x + silu(conv)
    hn = ln(h, p["g1"][0], p["be1"][0])
    y1 = silu(hn @ p["w1t"] + p["b1"][0])
    y2 = h @ p["w2t"] + p["b2"][0]
    return (y2 + y1) @ p["w3t"] + p["b3"][0]


# ---------------------------------- main -------------------------------------
if __name__ == "__main__":
    key = jax.random.PRNGKey(0)
    kx, kp = jax.random.split(key)

    B, in_channels, in_dim = 2, 1, 256
    out_channels, hidden_dim, out_dim = 20, 512, 99

    x = jax.random.normal(kx, (B, in_channels, in_dim), jnp.float32)
    params = init_params(kp, in_dim=in_dim, out_dim=out_dim,
                         hidden_dim=hidden_dim,
                         in_channels=in_channels, out_channels=out_channels)
    packed = pack_params(params, out_dim)

    out = mlp_decoder_pallas(x, packed)
    out = jax.block_until_ready(out)

    ref = mlp_decoder_ref(x, params)
    assert out.shape == (B, out_channels, out_dim)
    np.testing.assert_allclose(np.asarray(out), np.asarray(ref),
                               rtol=2e-4, atol=2e-4)
    print("KERNEL_OK")
</pallas_src>

<mosaic_0001>
module attributes {stable_mosaic.version = 11 : i64} {
  func.func @_mlp_decoder_kernel(%arg0: memref<2x256xf32, #tpu.memory_space<vmem>>, %arg1: memref<4x256xf32, #tpu.memory_space<vmem>>, %arg2: memref<20x1xf32, #tpu.memory_space<vmem>>, %arg3: memref<20x1xf32, #tpu.memory_space<vmem>>, %arg4: memref<257x512xf32, #tpu.memory_space<vmem>>, %arg5: memref<257x512xf32, #tpu.memory_space<vmem>>, %arg6: memref<513x128xf32, #tpu.memory_space<vmem>>, %arg7: memref<40x128xf32, #tpu.memory_space<vmem>>) attributes {dimension_semantics = [], scalar_prefetch = 0 : i64, scratch_operands = 0 : i64, tpu.core_type = #tpu.core_type<tc>} {
    %c0 = arith.constant 0 : index
    %c0_0 = arith.constant 0 : index
    %0 = vector.load %arg1[%c0, %c0_0] : memref<4x256xf32, #tpu.memory_space<vmem>>, vector<1x256xf32>
    %c1 = arith.constant 1 : index
    %c0_1 = arith.constant 0 : index
    %1 = vector.load %arg1[%c1, %c0_1] : memref<4x256xf32, #tpu.memory_space<vmem>>, vector<1x256xf32>
    %c2 = arith.constant 2 : index
    %c0_2 = arith.constant 0 : index
    %2 = vector.load %arg1[%c2, %c0_2] : memref<4x256xf32, #tpu.memory_space<vmem>>, vector<1x256xf32>
    %c3 = arith.constant 3 : index
    %c0_3 = arith.constant 0 : index
    %3 = vector.load %arg1[%c3, %c0_3] : memref<4x256xf32, #tpu.memory_space<vmem>>, vector<1x256xf32>
    %c0_4 = arith.constant 0 : index
    %c0_5 = arith.constant 0 : index
    %4 = vector.load %arg0[%c0_4, %c0_5] : memref<2x256xf32, #tpu.memory_space<vmem>>, vector<2x256xf32>
    %cst = arith.constant dense<0.000000e+00> : vector<2xf32>
    %5 = vector.multi_reduction <add>, %4, %cst [1] : vector<2x256xf32> to vector<2xf32>
    %6 = vector.shape_cast %5 : vector<2xf32> to vector<2x1xf32>
    %cst_6 = arith.constant 2.560000e+02 : f32
    %7 = vector.broadcast %cst_6 : f32 to vector<2x1xf32>
    %8 = arith.divf %6, %7 : vector<2x1xf32>
    %9 = vector.broadcast %8 : vector<2x1xf32> to vector<2x256xf32>
    %10 = arith.subf %4, %9 : vector<2x256xf32>
    %11 = arith.mulf %10, %10 : vector<2x256xf32>
    %cst_7 = arith.constant dense<0.000000e+00> : vector<2xf32>
    %12 = vector.multi_reduction <add>, %11, %cst_7 [1] : vector<2x256xf32> to vector<2xf32>
    %13 = vector.shape_cast %12 : vector<2xf32> to vector<2x1xf32>
    %cst_8 = arith.constant 2.560000e+02 : f32
    %14 = vector.broadcast %cst_8 : f32 to vector<2x1xf32>
    %15 = arith.divf %13, %14 : vector<2x1xf32>
    %16 = vector.broadcast %8 : vector<2x1xf32> to vector<2x256xf32>
    %17 = arith.subf %4, %16 : vector<2x256xf32>
    %cst_9 = arith.constant 9.99999974E-6 : f32
    %18 = vector.broadcast %cst_9 : f32 to vector<2x1xf32>
    %19 = arith.addf %15, %18 : vector<2x1xf32>
    %20 = math.rsqrt %19 : vector<2x1xf32>
    %21 = vector.broadcast %20 : vector<2x1xf32> to vector<2x256xf32>
    %22 = arith.mulf %17, %21 : vector<2x256xf32>
    %23 = vector.broadcast %0 : vector<1x256xf32> to vector<2x256xf32>
    %24 = arith.mulf %22, %23 : vector<2x256xf32>
    %25 = vector.broadcast %1 : vector<1x256xf32> to vector<2x256xf32>
    %26 = arith.addf %24, %25 : vector<2x256xf32>
    %c0_10 = arith.constant 0 : index
    %c0_11 = arith.constant 0 : index
    %27 = vector.load %arg2[%c0_10, %c0_11] : memref<20x1xf32, #tpu.memory_space<vmem>>, vector<20x1xf32>
    %c0_12 = arith.constant 0 : index
    %c0_13 = arith.constant 0 : index
    %28 = vector.load %arg3[%c0_12, %c0_13] : memref<20x1xf32, #tpu.memory_space<vmem>>, vector<20x1xf32>
    %29 = vector.extract_strided_slice %26 {offsets = [0, 0], sizes = [1, 256], strides = [1, 1]} : vector<2x256xf32> to vector<1x256xf32>
    %30 = vector.broadcast %29 : vector<1x256xf32> to vector<20x256xf32>
    %31 = vector.broadcast %27 : vector<20x1xf32> to vector<20x256xf32>
    %32 = arith.mulf %30, %31 : vector<20x256xf32>
    %33 = vector.broadcast %28 : vector<20x1xf32> to vector<20x256xf32>
    %34 = arith.addf %32, %33 : vector<20x256xf32>
    %35 = vector.extract_strided_slice %4 {offsets = [0, 0], sizes = [1, 256], strides = [1, 1]} : vector<2x256xf32> to vector<1x256xf32>
    %36 = arith.negf %34 : vector<20x256xf32>
    %37 = math.exp %36 : vector<20x256xf32>
    %cst_14 = arith.constant 1.000000e+00 : f32
    %38 = vector.broadcast %cst_14 : f32 to vector<20x256xf32>
    %39 = arith.addf %38, %37 : vector<20x256xf32>
    %40 = arith.divf %38, %39 : vector<20x256xf32>
    %41 = arith.mulf %34, %40 : vector<20x256xf32>
    %42 = vector.broadcast %35 : vector<1x256xf32> to vector<20x256xf32>
    %43 = arith.addf %42, %41 : vector<20x256xf32>
    %44 = vector.extract_strided_slice %26 {offsets = [1, 0], sizes = [1, 256], strides = [1, 1]} : vector<2x256xf32> to vector<1x256xf32>
    %45 = vector.broadcast %44 : vector<1x256xf32> to vector<20x256xf32>
    %46 = vector.broadcast %27 : vector<20x1xf32> to vector<20x256xf32>
    %47 = arith.mulf %45, %46 : vector<20x256xf32>
    %48 = vector.broadcast %28 : vector<20x1xf32> to vector<20x256xf32>
    %49 = arith.addf %47, %48 : vector<20x256xf32>
    %50 = vector.extract_strided_slice %4 {offsets = [1, 0], sizes = [1, 256], strides = [1, 1]} : vector<2x256xf32> to vector<1x256xf32>
    %51 = arith.negf %49 : vector<20x256xf32>
    %52 = math.exp %51 : vector<20x256xf32>
    %cst_15 = arith.constant 1.000000e+00 : f32
    %53 = vector.broadcast %cst_15 : f32 to vector<20x256xf32>
    %54 = arith.addf %53, %52 : vector<20x256xf32>
    %55 = arith.divf %53, %54 : vector<20x256xf32>
    %56 = arith.mulf %49, %55 : vector<20x256xf32>
    %57 = vector.broadcast %50 : vector<1x256xf32> to vector<20x256xf32>
    %58 = arith.addf %57, %56 : vector<20x256xf32>
    %59 = tpu.concatenate %43, %58 in 0 : vector<20x256xf32>, vector<20x256xf32> -> vector<40x256xf32>
    %cst_16 = arith.constant dense<0.000000e+00> : vector<40xf32>
    %60 = vector.multi_reduction <add>, %59, %cst_16 [1] : vector<40x256xf32> to vector<40xf32>
    %61 = vector.shape_cast %60 : vector<40xf32> to vector<40x1xf32>
    %cst_17 = arith.constant 2.560000e+02 : f32
    %62 = vector.broadcast %cst_17 : f32 to vector<40x1xf32>
    %63 = arith.divf %61, %62 : vector<40x1xf32>
    %64 = vector.broadcast %63 : vector<40x1xf32> to vector<40x256xf32>
    %65 = arith.subf %59, %64 : vector<40x256xf32>
    %66 = arith.mulf %65, %65 : vector<40x256xf32>
    %cst_18 = arith.constant dense<0.000000e+00> : vector<40xf32>
    %67 = vector.multi_reduction <add>, %66, %cst_18 [1] : vector<40x256xf32> to vector<40xf32>
    %68 = vector.shape_cast %67 : vector<40xf32> to vector<40x1xf32>
    %cst_19 = arith.constant 2.560000e+02 : f32
    %69 = vector.broadcast %cst_19 : f32 to vector<40x1xf32>
    %70 = arith.divf %68, %69 : vector<40x1xf32>
    %71 = vector.broadcast %63 : vector<40x1xf32> to vector<40x256xf32>
    %72 = arith.subf %59, %71 : vector<40x256xf32>
    %cst_20 = arith.constant 9.99999974E-6 : f32
    %73 = vector.broadcast %cst_20 : f32 to vector<40x1xf32>
    %74 = arith.addf %70, %73 : vector<40x1xf32>
    %75 = math.rsqrt %74 : vector<40x1xf32>
    %76 = vector.broadcast %75 : vector<40x1xf32> to vector<40x256xf32>
    %77 = arith.mulf %72, %76 : vector<40x256xf32>
    %78 = vector.broadcast %2 : vector<1x256xf32> to vector<40x256xf32>
    %79 = arith.mulf %77, %78 : vector<40x256xf32>
    %80 = vector.broadcast %3 : vector<1x256xf32> to vector<40x256xf32>
    %81 = arith.addf %79, %80 : vector<40x256xf32>
    %c0_21 = arith.constant 0 : index
    %c0_22 = arith.constant 0 : index
    %82 = vector.load %arg4[%c0_21, %c0_22] : memref<257x512xf32, #tpu.memory_space<vmem>>, vector<256x512xf32>
    %c256 = arith.constant 256 : index
    %c0_23 = arith.constant 0 : index
    %83 = vector.load %arg4[%c256, %c0_23] : memref<257x512xf32, #tpu.memory_space<vmem>>, vector<1x512xf32>
    %c0_24 = arith.constant 0 : index
    %c0_25 = arith.constant 0 : index
    %84 = vector.load %arg5[%c0_24, %c0_25] : memref<257x512xf32, #tpu.memory_space<vmem>>, vector<256x512xf32>
    %c256_26 = arith.constant 256 : index
    %c0_27 = arith.constant 0 : index
    %85 = vector.load %arg5[%c256_26, %c0_27] : memref<257x512xf32, #tpu.memory_space<vmem>>, vector<1x512xf32>
    %c0_28 = arith.constant 0 : index
    %c0_29 = arith.constant 0 : index
    %86 = vector.load %arg6[%c0_28, %c0_29] : memref<513x128xf32, #tpu.memory_space<vmem>>, vector<512x128xf32>
    %c512 = arith.constant 512 : index
    %c0_30 = arith.constant 0 : index
    %87 = vector.load %arg6[%c512, %c0_30] : memref<513x128xf32, #tpu.memory_space<vmem>>, vector<1x128xf32>
    %cst_31 = arith.constant dense<0.000000e+00> : vector<40x512xf32>
    %88 = tpu.matmul %81, %82, %cst_31 {dimension_numbers = #tpu.dot_dimension_numbers<[1], [0], [0], [1], [0, 0, 1, 1], [], []>} : vector<40x256xf32>, vector<256x512xf32>, vector<40x512xf32> -> vector<40x512xf32>
    %89 = vector.broadcast %83 : vector<1x512xf32> to vector<40x512xf32>
    %90 = arith.addf %88, %89 : vector<40x512xf32>
    %91 = arith.negf %90 : vector<40x512xf32>
    %92 = math.exp %91 : vector<40x512xf32>
    %cst_32 = arith.constant 1.000000e+00 : f32
    %93 = vector.broadcast %cst_32 : f32 to vector<40x512xf32>
    %94 = arith.addf %93, %92 : vector<40x512xf32>
    %95 = arith.divf %93, %94 : vector<40x512xf32>
    %96 = arith.mulf %90, %95 : vector<40x512xf32>
    %cst_33 = arith.constant dense<0.000000e+00> : vector<40x512xf32>
    %97 = tpu.matmul %59, %84, %cst_33 {dimension_numbers = #tpu.dot_dimension_numbers<[1], [0], [0], [1], [0, 0, 1, 1], [], []>} : vector<40x256xf32>, vector<256x512xf32>, vector<40x512xf32> -> vector<40x512xf32>
    %98 = vector.broadcast %85 : vector<1x512xf32> to vector<40x512xf32>
    %99 = arith.addf %97, %98 : vector<40x512xf32>
    %100 = arith.addf %96, %99 : vector<40x512xf32>
    %cst_34 = arith.constant dense<0.000000e+00> : vector<40x128xf32>
    %101 = tpu.matmul %100, %86, %cst_34 {dimension_numbers = #tpu.dot_dimension_numbers<[1], [0], [0], [1], [0, 0, 1, 1], [], []>} : vector<40x512xf32>, vector<512x128xf32>, vector<40x128xf32> -> vector<40x128xf32>
    %102 = vector.broadcast %87 : vector<1x128xf32> to vector<40x128xf32>
    %103 = arith.addf %101, %102 : vector<40x128xf32>
    %c0_35 = arith.constant 0 : index
    %c0_36 = arith.constant 0 : index
    %104 = vector.load %arg7[%c0_35, %c0_36] : memref<40x128xf32, #tpu.memory_space<vmem>>, vector<40x128xf32>
    tpu.vector_store %arg7[%c0_35, %c0_36], %103 {strides = array<i32>} : memref<40x128xf32, #tpu.memory_space<vmem>>, vector<40x128xf32>,
    return
  }
}

</mosaic_0001>

<llo_original>
// kernel: tpu_custom_call.1
$region0: #{tpu_custom_call.1}
  #allocation0 [shape = 'u32[]', space=smem, size = 0x4, offset = 0x4, fixed_abs, tag = 'smem constant byte address 0x4 - core index']
  #allocation1 [shape = 'u32[144,128]{1,0:T(1,128)}', space=vmem, size = 0x12000, scoped, tag = 'internal scratch']
  %s0 = inlined_call_operand.vmem [shape: f32[2,256], index: 0, kind: input, shape index: {}]
  %s1 = inlined_call_operand.vmem [shape: f32[4,256], index: 1, kind: input, shape index: {}]
  %s2 = inlined_call_operand.vmem [shape: f32[20,1], index: 2, kind: input, shape index: {}]
  %s3 = inlined_call_operand.vmem [shape: f32[20,1], index: 3, kind: input, shape index: {}]
  %s4 = inlined_call_operand.hbm [shape: f32[257,512], index: 4, kind: input, shape index: {}]
  %s5 = inlined_call_operand.hbm [shape: f32[257,512], index: 5, kind: input, shape index: {}]
  %s6 = inlined_call_operand.hbm [shape: f32[513,128], index: 6, kind: input, shape index: {}]
  %s7 = inlined_call_operand.hbm [shape: f32[40,128], index: 7, kind: output, shape index: {}]
  %s8 = sld [smem:[#allocation0]]
  $region50: #{tpu_custom_call.1} parent=0
    _
  %s10 = ssub.s32 1, %s8
  %s11 = scalar_select 0, %s10, %s8
  $region1: #{tpu_custom_call.1} parent=0
    #allocation2 [shape = 'u8[540672]{0}', space=vmem, size = 0x84000, scoped, tag = 'input window, operand 4, single buffered']
    #allocation3 [shape = 's32[1]{0}', space=sflag, size = 0x4, scoped, tag = 'scoped memory for tpu_custom_call.1']
    #allocation4 [shape = 's32[1]{0}', space=sflag, size = 0x4, scoped, tag = 'scoped memory for tpu_custom_call.1']
    #allocation5 [shape = 'u8[540672]{0}', space=vmem, size = 0x84000, scoped, tag = 'input window, operand 5, single buffered']
    #allocation6 [shape = 's32[1]{0}', space=sflag, size = 0x4, scoped, tag = 'scoped memory for tpu_custom_call.1']
    #allocation7 [shape = 'u8[266240]{0}', space=vmem, size = 0x41000, scoped, tag = 'input window, operand 6, single buffered']
    #allocation8 [shape = 'u8[20480]{0}', space=vmem, size = 0x5000, scoped, tag = 'output window, operand 0, single buffered']
    %12 = vsyncpa [#allocation3], 0
    %13 = vsyncpa [#allocation6], 0
    %14 = vsyncpa [#allocation4], 0
    // Predicated region
    $region2: #{tpu_custom_call.1} parent=1 // pred_check
      _
    $region3: #{tpu_custom_call.1} parent=1 // pred_check_branch
      %16 = sbr.rel (0) target = $region5
    $region4: #{tpu_custom_call.1} parent=1 // pred_region
      _
    $region5: #{tpu_custom_call.1} parent=1 // pred_fallthru
      _
    // Predicated region
    $region6: #{tpu_custom_call.1} parent=1 // pred_check
      _
    $region7: #{tpu_custom_call.1} parent=1 // pred_check_branch
      %18 = sbr.rel (0) target = $region9
    $region8: #{tpu_custom_call.1} parent=1 // pred_region
      _
    $region9: #{tpu_custom_call.1} parent=1 // pred_fallthru
      _
    // Predicated region
    $region10: #{tpu_custom_call.1} parent=1 // pred_check
      _
    $region11: #{tpu_custom_call.1} parent=1 // pred_check_branch
      %20 = sbr.rel (0) target = $region13
    $region12: #{tpu_custom_call.1} parent=1 // pred_region
      _
    $region13: #{tpu_custom_call.1} parent=1 // pred_fallthru
      _
    // Predicated region
    $region14: #{tpu_custom_call.1} parent=1 // pred_check
      _
    $region15: #{tpu_custom_call.1} parent=1 // pred_check_branch
      %22 = sbr.rel (0) target = $region17
    $region16: #{tpu_custom_call.1} parent=1 // pred_region
      _
    $region17: #{tpu_custom_call.1} parent=1 // pred_fallthru
      _
    // Predicated region
    $region18: #{tpu_custom_call.1} parent=1 // pred_check
      _
    $region19: #{tpu_custom_call.1} parent=1 // pred_check_branch
      %24 = sbr.rel (0) target = $region21
    $region20: #{tpu_custom_call.1} parent=1 // pred_region
      %s26 = ssub.s32 16896, 16896
      %27 = vsyncadd [#allocation3], %s26
      %s28 = sshll.u32 [#allocation2], 4
      %s29 = int_to_ptr.vmem [resolvable:$true] %s28
      %34 = dma.hbm_to_vmem [thread:$0]  %s4, 16896, %s29, [#allocation3], 512, 512, 32
    $region21: #{tpu_custom_call.1} parent=1 // pred_fallthru
      _
    // Predicated region
    $region22: #{tpu_custom_call.1} parent=1 // pred_check
      _
    $region23: #{tpu_custom_call.1} parent=1 // pred_check_branch
      %36 = sbr.rel (0) target = $region25
    $region24: #{tpu_custom_call.1} parent=1 // pred_region
      %s38 = ssub.s32 16896, 16896
      %39 = vsyncadd [#allocation6], %s38
      %s40 = sshll.u32 [#allocation5], 4
      %s41 = int_to_ptr.vmem [resolvable:$true] %s40
      %46 = dma.hbm_to_vmem [thread:$0]  %s5, 16896, %s41, [#allocation6], 512, 512, 32
    $region25: #{tpu_custom_call.1} parent=1 // pred_fallthru
      _
    // Predicated region
    $region26: #{tpu_custom_call.1} parent=1 // pred_check
      _
    $region27: #{tpu_custom_call.1} parent=1 // pred_check_branch
      %48 = sbr.rel (0) target = $region29
    $region28: #{tpu_custom_call.1} parent=1 // pred_region
      %s50 = ssub.s32 8320, 8320
      %51 = vsyncadd [#allocation6], %s50
      %s52 = sshll.u32 [#allocation7], 4
      %s53 = int_to_ptr.vmem [resolvable:$true] %s52
      %58 = dma.hbm_to_vmem [thread:$0]  %s6, 8320, %s53, [#allocation6], 128, 128, 8
    $region29: #{tpu_custom_call.1} parent=1 // pred_fallthru
      _
    // Predicated region
    $region30: #{tpu_custom_call.1} parent=1 // pred_check
      _
    $region31: #{tpu_custom_call.1} parent=1 // pred_check_branch
      %60 = sbr.rel (0) target = $region33
    $region32: #{tpu_custom_call.1} parent=1 // pred_region
      %61 = dma.done [#allocation3], 16896
    $region33: #{tpu_custom_call.1} parent=1 // pred_fallthru
      _
    // Predicated region
    $region34: #{tpu_custom_call.1} parent=1 // pred_check
      _
    $region35: #{tpu_custom_call.1} parent=1 // pred_check_branch
      %63 = sbr.rel (0) target = $region37
    $region36: #{tpu_custom_call.1} parent=1 // pred_region
      %64 = dma.done [#allocation6], 16896
    $region37: #{tpu_custom_call.1} parent=1 // pred_fallthru
      _
    // Predicated region
    $region38: #{tpu_custom_call.1} parent=1 // pred_check
      _
    $region39: #{tpu_custom_call.1} parent=1 // pred_check_branch
      %66 = sbr.rel (0) target = $region41
    $region40: #{tpu_custom_call.1} parent=1 // pred_region
      %67 = dma.done [#allocation6], 8320
    $region41: #{tpu_custom_call.1} parent=1 // pred_fallthru
      _
    %v68 = vld [vmem:[%s1] ss:$4 sm:$0x3]
    %s69 = scalar_lea.vmem %s1, 1
    %v70 = vld [vmem:[%s69] ss:$4 sm:$0x3]
    %s71 = scalar_lea.vmem %s1, 2
    %v72 = vld [vmem:[%s71] ss:$4 sm:$0x3]
    %s73 = scalar_lea.vmem %s1, 3
    %v74 = vld [vmem:[%s73] ss:$4 sm:$0x3]
    %v75 = vld [vmem:[%s0] sm:$0xf]
    %v78 = vunpack.c.l.s4 1983009808
    %v79 = vunpack.c.0.s8 %v78
    %v80 = vlaneseq
    %v81 = vshrl.u32 %v80, 7
    %v82 = vsub.s32 %v79, %v81
    %v83 = vrot.slane %v75, %v82
    %v84 = vcombine.high %v83, %v83
    %vm87 = vcmask 1041408
    %v88 = vsel %vm87, %v83, 0.0
    %v89 = vsel %vm87, %v84, 0.0
    %v90 = vadd.f32 %v88, %v89
    %91 = vadd.xlane.f32.xlu0 %v90
    %v92 = vpop.xlane.xlu0 %91
    %v93 = vrcp.pop 256.0
    %v94 = vmul.f32 %v92, %v93
    %v97 = vunpack.c.l.s4 269488144
    %v98 = vunpack.c.0.s8 %v97
    %v99 = vlaneseq
    %v100 = vshrl.u32 %v99, 7
    %v101 = vsub.s32 %v98, %v100
    %v102 = vrot.slane %v94, %v101
    %v104 = vsub.f32 %v75, %v102
    %v105 = vmul.f32 %v104, %v104
    %v108 = vunpack.c.l.s4 1983009808
    %v109 = vunpack.c.0.s8 %v108
    %v110 = vlaneseq
    %v111 = vshrl.u32 %v110, 7
    %v112 = vsub.s32 %v109, %v111
    %v113 = vrot.slane %v105, %v112
    %v114 = vcombine.high %v113, %v113
    %v117 = vsel %vm87, %v113, 0.0
    %v118 = vsel %vm87, %v114, 0.0
    %v119 = vadd.f32 %v117, %v118
    %120 = vadd.xlane.f32.xlu0 %v119
    %v121 = vpop.xlane.xlu0 %120
    %v122 = vmul.f32 %v121, %v93
    %v123 = vadd.f32 %v122, 1e-05
    %v124 = vrsqrt.pop %v123
    %v127 = vunpack.c.l.s4 269488144
    %v128 = vunpack.c.0.s8 %v127
    %v129 = vlaneseq
    %v130 = vshrl.u32 %v129, 7
    %v131 = vsub.s32 %v128, %v130
    %v132 = vrot.slane %v124, %v131
    %v134 = vmul.f32 %v104, %v132
    %v136 = vlaneseq
    %v137 = vshrl.u32 %v136, 7
    %v138 = vsub.s32 0, %v137
    %v139 = vrot.slane %v68, %v138
    %v140 = vlaneseq
    %v141 = vshrl.u32 %v140, 7
    %v142 = vsub.s32 1, %v141
    %v143 = vrot.slane %v68, %v142
    %v144 = vcombine.low %v139, %v143
    %v146 = vunpack.c.l.s4 1983009808
    %v147 = vunpack.c.0.s8 %v146
    %v148 = vlaneseq
    %v149 = vshrl.u32 %v148, 7
    %v150 = vsub.s32 %v147, %v149
    %v151 = vrot.slane %v144, %v150
    %v153 = vmul.f32 %v134, %v151
    %v155 = vlaneseq
    %v156 = vshrl.u32 %v155, 7
    %v157 = vsub.s32 0, %v156
    %v158 = vrot.slane %v70, %v157
    %v159 = vlaneseq
    %v160 = vshrl.u32 %v159, 7
    %v161 = vsub.s32 1, %v160
    %v162 = vrot.slane %v70, %v161
    %v163 = vcombine.low %v158, %v162
    %v165 = vunpack.c.l.s4 1983009808
    %v166 = vunpack.c.0.s8 %v165
    %v167 = vlaneseq
    %v168 = vshrl.u32 %v167, 7
    %v169 = vsub.s32 %v166, %v168
    %v170 = vrot.slane %v163, %v169
    %v172 = vadd.f32 %v153, %v170
    %v173 = vld [vmem:[%s2] sm:$0xff]
    %v174 = vld [vmem:[%s2 + $0x8] sm:$0xff]
    %v175 = vld [vmem:[%s2 + $0x10] sm:$0xf]
    %v176 = vld [vmem:[%s3] sm:$0xff]
    %v177 = vld [vmem:[%s3 + $0x8] sm:$0xff]
    %v178 = vld [vmem:[%s3 + $0x10] sm:$0xf]
    %v180 = vlaneseq
    %v181 = vshrl.u32 %v180, 7
    %v182 = vsub.s32 0, %v181
    %v183 = vrot.slane %v172, %v182
    %v184 = vlaneseq
    %v185 = vshrl.u32 %v184, 7
    %v186 = vsub.s32 2, %v185
    %v187 = vrot.slane %v172, %v186
    %v190 = vlaneseq
    %v191 = vshrl.u32 %v190, 7
    %v192 = vsub.s32 0, %v191
    %v193 = vrot.slane %v183, %v192
    %v194 = vlaneseq
    %v195 = vshrl.u32 %v194, 7
    %v196 = vsub.s32 0, %v195
    %v197 = vrot.slane %v187, %v196
    %199 = vset.pattern.permute.xlu0 0
    %200 = vperm.xlu0 %199, %v173
    %v201 = vpop.permute.xlu0 %200
    %204 = vset.pattern.permute.xlu0 0
    %205 = vperm.xlu0 %204, %v174
    %v206 = vpop.permute.xlu0 %205
    %209 = vset.pattern.permute.xlu0 0
    %210 = vperm.xlu0 %209, %v175
    %v211 = vpop.permute.xlu0 %210
    %v213 = vmul.f32 %v193, %v201
    %v214 = vmul.f32 %v197, %v201
    %v215 = vmul.f32 %v193, %v206
    %v216 = vmul.f32 %v197, %v206
    %v217 = vmul.f32 %v193, %v211
    %v218 = vmul.f32 %v197, %v211
    %220 = vset.pattern.permute.xlu0 0
    %221 = vperm.xlu0 %220, %v176
    %v222 = vpop.permute.xlu0 %221
    %225 = vset.pattern.permute.xlu0 0
    %226 = vperm.xlu0 %225, %v177
    %v227 = vpop.permute.xlu0 %226
    %230 = vset.pattern.permute.xlu0 0
    %231 = vperm.xlu0 %230, %v178
    %v232 = vpop.permute.xlu0 %231
    %v234 = vadd.f32 %v213, %v222
    %v235 = vadd.f32 %v214, %v222
    %v236 = vadd.f32 %v215, %v227
    %v237 = vadd.f32 %v216, %v227
    %v238 = vadd.f32 %v217, %v232
    %v239 = vadd.f32 %v218, %v232
    %v240 = vxor.u32 %v234, 2147483648
    %v241 = vxor.u32 %v235, 2147483648
    %v242 = vxor.u32 %v236, 2147483648
    %v243 = vxor.u32 %v237, 2147483648
    %v244 = vxor.u32 %v238, 2147483648
    %v245 = vxor.u32 %v239, 2147483648
    %v246 = vmul.f32 %v240, 1.442695
    %v247 = vpow.pop %v246
    %v248 = vmul.f32 %v241, 1.442695
    %v249 = vpow.pop %v248
    %v250 = vmul.f32 %v242, 1.442695
    %v251 = vpow.pop %v250
    %v252 = vmul.f32 %v243, 1.442695
    %v253 = vpow.pop %v252
    %v254 = vmul.f32 %v244, 1.442695
    %v255 = vpow.pop %v254
    %v256 = vmul.f32 %v245, 1.442695
    %v257 = vpow.pop %v256
    %v258 = vadd.f32 %v247, 1.0
    %v259 = vadd.f32 %v249, 1.0
    %v260 = vadd.f32 %v251, 1.0
    %v261 = vadd.f32 %v253, 1.0
    %v262 = vadd.f32 %v255, 1.0
    %v263 = vadd.f32 %v257, 1.0
    %v264 = vrcp.pop %v258
    %v265 = vmul.f32 1.0, %v264
    %v266 = vrcp.pop %v259
    %v267 = vmul.f32 1.0, %v266
    %v268 = vrcp.pop %v260
    %v269 = vmul.f32 1.0, %v268
    %v270 = vrcp.pop %v261
    %v271 = vmul.f32 1.0, %v270
    %v272 = vrcp.pop %v262
    %v273 = vmul.f32 1.0, %v272
    %v274 = vrcp.pop %v263
    %v275 = vmul.f32 1.0, %v274
    %v276 = vmul.f32 %v234, %v265
    %v277 = vmul.f32 %v235, %v267
    %v278 = vmul.f32 %v236, %v269
    %v279 = vmul.f32 %v237, %v271
    %v280 = vmul.f32 %v238, %v273
    %v281 = vmul.f32 %v239, %v275
    %v282 = vlaneseq
    %v283 = vshrl.u32 %v282, 7
    %v284 = vsub.s32 0, %v283
    %v285 = vrot.slane %v75, %v284
    %v286 = vlaneseq
    %v287 = vshrl.u32 %v286, 7
    %v288 = vsub.s32 2, %v287
    %v289 = vrot.slane %v75, %v288
    %v292 = vlaneseq
    %v293 = vshrl.u32 %v292, 7
    %v294 = vsub.s32 0, %v293
    %v295 = vrot.slane %v285, %v294
    %v296 = vlaneseq
    %v297 = vshrl.u32 %v296, 7
    %v298 = vsub.s32 0, %v297
    %v299 = vrot.slane %v289, %v298
    %v300 = vadd.f32 %v295, %v276
    %v301 = vadd.f32 %v299, %v277
    %v302 = vadd.f32 %v295, %v278
    %v303 = vadd.f32 %v299, %v279
    %v304 = vadd.f32 %v295, %v280
    %v305 = vadd.f32 %v299, %v281
    %v306 = vlaneseq
    %v307 = vshrl.u32 %v306, 7
    %v308 = vsub.s32 1, %v307
    %v309 = vrot.slane %v172, %v308
    %v310 = vlaneseq
    %v311 = vshrl.u32 %v310, 7
    %v312 = vsub.s32 3, %v311
    %v313 = vrot.slane %v172, %v312
    %v316 = vlaneseq
    %v317 = vshrl.u32 %v316, 7
    %v318 = vsub.s32 1, %v317
    %v319 = vrot.slane %v309, %v318
    %v320 = vlaneseq
    %v321 = vshrl.u32 %v320, 7
    %v322 = vsub.s32 1, %v321
    %v323 = vrot.slane %v313, %v322
    %v324 = vmul.f32 %v319, %v201
    %v325 = vmul.f32 %v323, %v201
    %v326 = vmul.f32 %v319, %v206
    %v327 = vmul.f32 %v323, %v206
    %v328 = vmul.f32 %v319, %v211
    %v329 = vmul.f32 %v323, %v211
    %v330 = vadd.f32 %v324, %v222
    %v331 = vadd.f32 %v325, %v222
    %v332 = vadd.f32 %v326, %v227
    %v333 = vadd.f32 %v327, %v227
    %v334 = vadd.f32 %v328, %v232
    %v335 = vadd.f32 %v329, %v232
    %v336 = vxor.u32 %v330, 2147483648
    %v337 = vxor.u32 %v331, 2147483648
    %v338 = vxor.u32 %v332, 2147483648
    %v339 = vxor.u32 %v333, 2147483648
    %v340 = vxor.u32 %v334, 2147483648
    %v341 = vxor.u32 %v335, 2147483648
    %v342 = vmul.f32 %v336, 1.442695
    %v343 = vpow.pop %v342
    %v344 = vmul.f32 %v337, 1.442695
    %v345 = vpow.pop %v344
    %v346 = vmul.f32 %v338, 1.442695
    %v347 = vpow.pop %v346
    %v348 = vmul.f32 %v339, 1.442695
    %v349 = vpow.pop %v348
    %v350 = vmul.f32 %v340, 1.442695
    %v351 = vpow.pop %v350
    %v352 = vmul.f32 %v341, 1.442695
    %v353 = vpow.pop %v352
    %v354 = vadd.f32 %v343, 1.0
    %v355 = vadd.f32 %v345, 1.0
    %v356 = vadd.f32 %v347, 1.0
    %v357 = vadd.f32 %v349, 1.0
    %v358 = vadd.f32 %v351, 1.0
    %v359 = vadd.f32 %v353, 1.0
    %v360 = vrcp.pop %v354
    %v361 = vmul.f32 1.0, %v360
    %v362 = vrcp.pop %v355
    %v363 = vmul.f32 1.0, %v362
    %v364 = vrcp.pop %v356
    %v365 = vmul.f32 1.0, %v364
    %v366 = vrcp.pop %v357
    %v367 = vmul.f32 1.0, %v366
    %v368 = vrcp.pop %v358
    %v369 = vmul.f32 1.0, %v368
    %v370 = vrcp.pop %v359
    %v371 = vmul.f32 1.0, %v370
    %v372 = vmul.f32 %v330, %v361
    %v373 = vmul.f32 %v331, %v363
    %v374 = vmul.f32 %v332, %v365
    %v375 = vmul.f32 %v333, %v367
    %v376 = vmul.f32 %v334, %v369
    %v377 = vmul.f32 %v335, %v371
    %v378 = vlaneseq
    %v379 = vshrl.u32 %v378, 7
    %v380 = vsub.s32 1, %v379
    %v381 = vrot.slane %v75, %v380
    %v382 = vlaneseq
    %v383 = vshrl.u32 %v382, 7
    %v384 = vsub.s32 3, %v383
    %v385 = vrot.slane %v75, %v384
    %v388 = vlaneseq
    %v389 = vshrl.u32 %v388, 7
    %v390 = vsub.s32 1, %v389
    %v391 = vrot.slane %v381, %v390
    %v392 = vlaneseq
    %v393 = vshrl.u32 %v392, 7
    %v394 = vsub.s32 1, %v393
    %v395 = vrot.slane %v385, %v394
    %v396 = vadd.f32 %v391, %v372
    %v397 = vadd.f32 %v395, %v373
    %v398 = vadd.f32 %v391, %v374
    %v399 = vadd.f32 %v395, %v375
    %v400 = vadd.f32 %v391, %v376
    %v401 = vadd.f32 %v395, %v377
    %vm408 = vcmask 1043456
    %v409 = vrot.slane %v396, 4
    %v410 = vrot.slane %v397, 4
    %v411 = vrot.slane %v398, 4
    %v412 = vsel %vm408, %v409, %v411
    %v413 = vrot.slane %v399, 4
    %v414 = vsel %vm408, %v410, %v413
    %v415 = vrot.slane %v400, 4
    %v416 = vsel %vm408, %v411, %v415
    %v417 = vrot.slane %v401, 4
    %v418 = vsel %vm408, %v413, %v417
    %v425 = vsel %vm408, %v304, %v409
    %v426 = vsel %vm408, %v305, %v410
    %v427 = vadd.f32 %v300, %v301
    %428 = vadd.xlane.f32.xlu0 %v427
    %v429 = vpop.xlane.xlu0 %428
    %v430 = vadd.f32 %v302, %v303
    %431 = vadd.xlane.f32.xlu0 %v430
    %v432 = vpop.xlane.xlu0 %431
    %v433 = vadd.f32 %v425, %v426
    %434 = vadd.xlane.f32.xlu0 %v433
    %v435 = vpop.xlane.xlu0 %434
    %v436 = vadd.f32 %v412, %v414
    %437 = vadd.xlane.f32.xlu0 %v436
    %v438 = vpop.xlane.xlu0 %437
    %v439 = vadd.f32 %v416, %v418
    %440 = vadd.xlane.f32.xlu0 %v439
    %v441 = vpop.xlane.xlu0 %440
    %v442 = vmul.f32 %v429, %v93
    %v443 = vmul.f32 %v432, %v93
    %v444 = vmul.f32 %v435, %v93
    %v445 = vmul.f32 %v438, %v93
    %v446 = vmul.f32 %v441, %v93
    %v447 = vsub.f32 %v300, %v442
    %v448 = vsub.f32 %v301, %v442
    %v449 = vsub.f32 %v302, %v443
    %v450 = vsub.f32 %v303, %v443
    %v451 = vsub.f32 %v425, %v444
    %v452 = vsub.f32 %v426, %v444
    %v453 = vsub.f32 %v412, %v445
    %v454 = vsub.f32 %v414, %v445
    %v455 = vsub.f32 %v416, %v446
    %v456 = vsub.f32 %v418, %v446
    %v457 = vmul.f32 %v447, %v447
    %v458 = vmul.f32 %v448, %v448
    %v459 = vmul.f32 %v449, %v449
    %v460 = vmul.f32 %v450, %v450
    %v461 = vmul.f32 %v451, %v451
    %v462 = vmul.f32 %v452, %v452
    %v463 = vmul.f32 %v453, %v453
    %v464 = vmul.f32 %v454, %v454
    %v465 = vmul.f32 %v455, %v455
    %v466 = vmul.f32 %v456, %v456
    %v467 = vadd.f32 %v457, %v458
    %468 = vadd.xlane.f32.xlu0 %v467
    %v469 = vpop.xlane.xlu0 %468
    %v470 = vadd.f32 %v459, %v460
    %471 = vadd.xlane.f32.xlu0 %v470
    %v472 = vpop.xlane.xlu0 %471
    %v473 = vadd.f32 %v461, %v462
    %474 = vadd.xlane.f32.xlu0 %v473
    %v475 = vpop.xlane.xlu0 %474
    %v476 = vadd.f32 %v463, %v464
    %477 = vadd.xlane.f32.xlu0 %v476
    %v478 = vpop.xlane.xlu0 %477
    %v479 = vadd.f32 %v465, %v466
    %480 = vadd.xlane.f32.xlu0 %v479
    %v481 = vpop.xlane.xlu0 %480
    %v482 = vmul.f32 %v469, %v93
    %v483 = vmul.f32 %v472, %v93
    %v484 = vmul.f32 %v475, %v93
    %v485 = vmul.f32 %v478, %v93
    %v486 = vmul.f32 %v481, %v93
    %v487 = vadd.f32 %v482, 1e-05
    %v488 = vadd.f32 %v483, 1e-05
    %v489 = vadd.f32 %v484, 1e-05
    %v490 = vadd.f32 %v485, 1e-05
    %v491 = vadd.f32 %v486, 1e-05
    %v492 = vrsqrt.pop %v487
    %v493 = vrsqrt.pop %v488
    %v494 = vrsqrt.pop %v489
    %v495 = vrsqrt.pop %v490
    %v496 = vrsqrt.pop %v491
    %v497 = vmul.f32 %v447, %v492
    %v498 = vmul.f32 %v448, %v492
    %v499 = vmul.f32 %v449, %v493
    %v500 = vmul.f32 %v450, %v493
    %v501 = vmul.f32 %v451, %v494
    %v502 = vmul.f32 %v452, %v494
    %v503 = vmul.f32 %v453, %v495
    %v504 = vmul.f32 %v454, %v495
    %v505 = vmul.f32 %v455, %v496
    %v506 = vmul.f32 %v456, %v496
    %v508 = vlaneseq
    %v509 = vshrl.u32 %v508, 7
    %v510 = vsub.s32 0, %v509
    %v511 = vrot.slane %v72, %v510
    %v512 = vlaneseq
    %v513 = vshrl.u32 %v512, 7
    %v514 = vsub.s32 1, %v513
    %v515 = vrot.slane %v72, %v514
    %v518 = vmul.f32 %v497, %v511
    %v519 = vmul.f32 %v498, %v515
    %v520 = vmul.f32 %v499, %v511
    %v521 = vmul.f32 %v500, %v515
    %v522 = vmul.f32 %v501, %v511
    %v523 = vmul.f32 %v502, %v515
    %v524 = vmul.f32 %v503, %v511
    %v525 = vmul.f32 %v504, %v515
    %v526 = vmul.f32 %v505, %v511
    %v527 = vmul.f32 %v506, %v515
    %v529 = vlaneseq
    %v530 = vshrl.u32 %v529, 7
    %v531 = vsub.s32 0, %v530
    %v532 = vrot.slane %v74, %v531
    %v533 = vlaneseq
    %v534 = vshrl.u32 %v533, 7
    %v535 = vsub.s32 1, %v534
    %v536 = vrot.slane %v74, %v535
    %v539 = vadd.f32 %v518, %v532
    %v540 = vadd.f32 %v519, %v536
    %v541 = vadd.f32 %v520, %v532
    %v542 = vadd.f32 %v521, %v536
    %v543 = vadd.f32 %v522, %v532
    %v544 = vadd.f32 %v523, %v536
    %v545 = vadd.f32 %v524, %v532
    %v546 = vadd.f32 %v525, %v536
    %v547 = vadd.f32 %v526, %v532
    %v548 = vadd.f32 %v527, %v536
    %v549 = vld [vmem:[#allocation2] sm:$0xff]
    %v550 = vld [vmem:[#allocation2 + $0x8] sm:$0xff]
    %v551 = vld [vmem:[#allocation2 + $0x10] sm:$0xff]
    %v552 = vld [vmem:[#allocation2 + $0x18] sm:$0xff]
    %v553 = vld [vmem:[#allocation2 + $0x20] sm:$0xff]
    %v554 = vld [vmem:[#allocation2 + $0x28] sm:$0xff]
    %v555 = vld [vmem:[#allocation2 + $0x30] sm:$0xff]
    %v556 = vld [vmem:[#allocation2 + $0x38] sm:$0xff]
    %v557 = vld [vmem:[#allocation2 + $0x40] sm:$0xff]
    %v558 = vld [vmem:[#allocation2 + $0x48] sm:$0xff]
    %v559 = vld [vmem:[#allocation2 + $0x50] sm:$0xff]
    %v560 = vld [vmem:[#allocation2 + $0x58] sm:$0xff]
    %v561 = vld [vmem:[#allocation2 + $0x60] sm:$0xff]
    %v562 = vld [vmem:[#allocation2 + $0x68] sm:$0xff]
    %v563 = vld [vmem:[#allocation2 + $0x70] sm:$0xff]
    %v564 = vld [vmem:[#allocation2 + $0x78] sm:$0xff]
    %v565 = vld [vmem:[#allocation2 + $0x80] sm:$0xff]
    %v566 = vld [vmem:[#allocation2 + $0x88] sm:$0xff]
    %v567 = vld [vmem:[#allocation2 + $0x90] sm:$0xff]
    %v568 = vld [vmem:[#allocation2 + $0x98] sm:$0xff]
    %v569 = vld [vmem:[#allocation2 + $0xa0] sm:$0xff]
    %v570 = vld [vmem:[#allocation2 + $0xa8] sm:$0xff]
    %v571 = vld [vmem:[#allocation2 + $0xb0] sm:$0xff]
    %v572 = vld [vmem:[#allocation2 + $0xb8] sm:$0xff]
    %v573 = vld [vmem:[#allocation2 + $0xc0] sm:$0xff]
    %v574 = vld [vmem:[#allocation2 + $0xc8] sm:$0xff]
    %v575 = vld [vmem:[#allocation2 + $0xd0] sm:$0xff]
    %v576 = vld [vmem:[#allocation2 + $0xd8] sm:$0xff]
    %v577 = vld [vmem:[#allocation2 + $0xe0] sm:$0xff]
    %v578 = vld [vmem:[#allocation2 + $0xe8] sm:$0xff]
    %v579 = vld [vmem:[#allocation2 + $0xf0] sm:$0xff]
    %v580 = vld [vmem:[#allocation2 + $0xf8] sm:$0xff]
    %v581 = vld [vmem:[#allocation2 + $0x100] sm:$0xff]
    %v582 = vld [vmem:[#allocation2 + $0x108] sm:$0xff]
    %v583 = vld [vmem:[#allocation2 + $0x110] sm:$0xff]
    %v584 = vld [vmem:[#allocation2 + $0x118] sm:$0xff]
    %v585 = vld [vmem:[#allocation2 + $0x120] sm:$0xff]
    %v586 = vld [vmem:[#allocation2 + $0x128] sm:$0xff]
    %v587 = vld [vmem:[#allocation2 + $0x130] sm:$0xff]
    %v588 = vld [vmem:[#allocation2 + $0x138] sm:$0xff]
    %v589 = vld [vmem:[#allocation2 + $0x140] sm:$0xff]
    %v590 = vld [vmem:[#allocation2 + $0x148] sm:$0xff]
    %v591 = vld [vmem:[#allocation2 + $0x150] sm:$0xff]
    %v592 = vld [vmem:[#allocation2 + $0x158] sm:$0xff]
    %v593 = vld [vmem:[#allocation2 + $0x160] sm:$0xff]
    %v594 = vld [vmem:[#allocation2 + $0x168] sm:$0xff]
    %v595 = vld [vmem:[#allocation2 + $0x170] sm:$0xff]
    %v596 = vld [vmem:[#allocation2 + $0x178] sm:$0xff]
    %v597 = vld [vmem:[#allocation2 + $0x180] sm:$0xff]
    %v598 = vld [vmem:[#allocation2 + $0x188] sm:$0xff]
    %v599 = vld [vmem:[#allocation2 + $0x190] sm:$0xff]
    %v600 = vld [vmem:[#allocation2 + $0x198] sm:$0xff]
    %v601 = vld [vmem:[#allocation2 + $0x1a0] sm:$0xff]
    %v602 = vld [vmem:[#allocation2 + $0x1a8] sm:$0xff]
    %v603 = vld [vmem:[#allocation2 + $0x1b0] sm:$0xff]
    %v604 = vld [vmem:[#allocation2 + $0x1b8] sm:$0xff]
    %v605 = vld [vmem:[#allocation2 + $0x1c0] sm:$0xff]
    %v606 = vld [vmem:[#allocation2 + $0x1c8] sm:$0xff]
    %v607 = vld [vmem:[#allocation2 + $0x1d0] sm:$0xff]
    %v608 = vld [vmem:[#allocation2 + $0x1d8] sm:$0xff]
    %v609 = vld [vmem:[#allocation2 + $0x1e0] sm:$0xff]
    %v610 = vld [vmem:[#allocation2 + $0x1e8] sm:$0xff]
    %v611 = vld [vmem:[#allocation2 + $0x1f0] sm:$0xff]
    %v612 = vld [vmem:[#allocation2 + $0x1f8] sm:$0xff]
    %v613 = vld [vmem:[#allocation2 + $0x200] sm:$0xff]
    %v614 = vld [vmem:[#allocation2 + $0x208] sm:$0xff]
    %v615 = vld [vmem:[#allocation2 + $0x210] sm:$0xff]
    %v616 = vld [vmem:[#allocation2 + $0x218] sm:$0xff]
    %v617 = vld [vmem:[#allocation2 + $0x220] sm:$0xff]
    %v618 = vld [vmem:[#allocation2 + $0x228] sm:$0xff]
    %v619 = vld [vmem:[#allocation2 + $0x230] sm:$0xff]
    %v620 = vld [vmem:[#allocation2 + $0x238] sm:$0xff]
    %v621 = vld [vmem:[#allocation2 + $0x240] sm:$0xff]
    %v622 = vld [vmem:[#allocation2 + $0x248] sm:$0xff]
    %v623 = vld [vmem:[#allocation2 + $0x250] sm:$0xff]
    %v624 = vld [vmem:[#allocation2 + $0x258] sm:$0xff]
    %v625 = vld [vmem:[#allocation2 + $0x260] sm:$0xff]
    %v626 = vld [vmem:[#allocation2 + $0x268] sm:$0xff]
    %v627 = vld [vmem:[#allocation2 + $0x270] sm:$0xff]
    %v628 = vld [vmem:[#allocation2 + $0x278] sm:$0xff]
    %v629 = vld [vmem:[#allocation2 + $0x280] sm:$0xff]
    %v630 = vld [vmem:[#allocation2 + $0x288] sm:$0xff]
    %v631 = vld [vmem:[#allocation2 + $0x290] sm:$0xff]
    %v632 = vld [vmem:[#allocation2 + $0x298] sm:$0xff]
    %v633 = vld [vmem:[#allocation2 + $0x2a0] sm:$0xff]
    %v634 = vld [vmem:[#allocation2 + $0x2a8] sm:$0xff]
    %v635 = vld [vmem:[#allocation2 + $0x2b0] sm:$0xff]
    %v636 = vld [vmem:[#allocation2 + $0x2b8] sm:$0xff]
    %v637 = vld [vmem:[#allocation2 + $0x2c0] sm:$0xff]
    %v638 = vld [vmem:[#allocation2 + $0x2c8] sm:$0xff]
    %v639 = vld [vmem:[#allocation2 + $0x2d0] sm:$0xff]
    %v640 = vld [vmem:[#allocation2 + $0x2d8] sm:$0xff]
    %v641 = vld [vmem:[#allocation2 + $0x2e0] sm:$0xff]
    %v642 = vld [vmem:[#allocation2 + $0x2e8] sm:$0xff]
    %v643 = vld [vmem:[#allocation2 + $0x2f0] sm:$0xff]
    %v644 = vld [vmem:[#allocation2 + $0x2f8] sm:$0xff]
    %v645 = vld [vmem:[#allocation2 + $0x300] sm:$0xff]
    %v646 = vld [vmem:[#allocation2 + $0x308] sm:$0xff]
    %v647 = vld [vmem:[#allocation2 + $0x310] sm:$0xff]
    %v648 = vld [vmem:[#allocation2 + $0x318] sm:$0xff]
    %v649 = vld [vmem:[#allocation2 + $0x320] sm:$0xff]
    %v650 = vld [vmem:[#allocation2 + $0x328] sm:$0xff]
    %v651 = vld [vmem:[#allocation2 + $0x330] sm:$0xff]
    %v652 = vld [vmem:[#allocation2 + $0x338] sm:$0xff]
    %v653 = vld [vmem:[#allocation2 + $0x340] sm:$0xff]
    %v654 = vld [vmem:[#allocation2 + $0x348] sm:$0xff]
    %v655 = vld [vmem:[#allocation2 + $0x350] sm:$0xff]
    %v656 = vld [vmem:[#allocation2 + $0x358] sm:$0xff]
    %v657 = vld [vmem:[#allocation2 + $0x360] sm:$0xff]
    %v658 = vld [vmem:[#allocation2 + $0x368] sm:$0xff]
    %v659 = vld [vmem:[#allocation2 + $0x370] sm:$0xff]
    %v660 = vld [vmem:[#allocation2 + $0x378] sm:$0xff]
    %v661 = vld [vmem:[#allocation2 + $0x380] sm:$0xff]
    %v662 = vld [vmem:[#allocation2 + $0x388] sm:$0xff]
    %v663 = vld [vmem:[#allocation2 + $0x390] sm:$0xff]
    %v664 = vld [vmem:[#allocation2 + $0x398] sm:$0xff]
    %v665 = vld [vmem:[#allocation2 + $0x3a0] sm:$0xff]
    %v666 = vld [vmem:[#allocation2 + $0x3a8] sm:$0xff]
    %v667 = vld [vmem:[#allocation2 + $0x3b0] sm:$0xff]
    %v668 = vld [vmem:[#allocation2 + $0x3b8] sm:$0xff]
    %v669 = vld [vmem:[#allocation2 + $0x3c0] sm:$0xff]
    %v670 = vld [vmem:[#allocation2 + $0x3c8] sm:$0xff]
    %v671 = vld [vmem:[#allocation2 + $0x3d0] sm:$0xff]
    %v672 = vld [vmem:[#allocation2 + $0x3d8] sm:$0xff]
    %v673 = vld [vmem:[#allocation2 + $0x3e0] sm:$0xff]
    %v674 = vld [vmem:[#allocation2 + $0x3e8] sm:$0xff]
    %v675 = vld [vmem:[#allocation2 + $0x3f0] sm:$0xff]
    %v676 = vld [vmem:[#allocation2 + $0x3f8] sm:$0xff]
    %s677 = scalar_lea.vmem [#allocation2], 1024
    %v678 = vld [vmem:[%s677] ss:$8 sm:$0xf]
    %v679 = vld [vmem:[#allocation5] sm:$0xff]
    %v680 = vld [vmem:[#allocation5 + $0x8] sm:$0xff]
    %v681 = vld [vmem:[#allocation5 + $0x10] sm:$0xff]
    %v682 = vld [vmem:[#allocation5 + $0x18] sm:$0xff]
    %v683 = vld [vmem:[#allocation5 + $0x20] sm:$0xff]
    %v684 = vld [vmem:[#allocation5 + $0x28] sm:$0xff]
    %v685 = vld [vmem:[#allocation5 + $0x30] sm:$0xff]
    %v686 = vld [vmem:[#allocation5 + $0x38] sm:$0xff]
    %v687 = vld [vmem:[#allocation5 + $0x40] sm:$0xff]
    %v688 = vld [vmem:[#allocation5 + $0x48] sm:$0xff]
    %v689 = vld [vmem:[#allocation5 + $0x50] sm:$0xff]
    %v690 = vld [vmem:[#allocation5 + $0x58] sm:$0xff]
    %v691 = vld [vmem:[#allocation5 + $0x60] sm:$0xff]
    %v692 = vld [vmem:[#allocation5 + $0x68] sm:$0xff]
    %v693 = vld [vmem:[#allocation5 + $0x70] sm:$0xff]
    %v694 = vld [vmem:[#allocation5 + $0x78] sm:$0xff]
    %v695 = vld [vmem:[#allocation5 + $0x80] sm:$0xff]
    %v696 = vld [vmem:[#allocation5 + $0x88] sm:$0xff]
    %v697 = vld [vmem:[#allocation5 + $0x90] sm:$0xff]
    %v698 = vld [vmem:[#allocation5 + $0x98] sm:$0xff]
    %v699 = vld [vmem:[#allocation5 + $0xa0] sm:$0xff]
    %v700 = vld [vmem:[#allocation5 + $0xa8] sm:$0xff]
    %v701 = vld [vmem:[#allocation5 + $0xb0] sm:$0xff]
    %v702 = vld [vmem:[#allocation5 + $0xb8] sm:$0xff]
    %v703 = vld [vmem:[#allocation5 + $0xc0] sm:$0xff]
    %v704 = vld [vmem:[#allocation5 + $0xc8] sm:$0xff]
    %v705 = vld [vmem:[#allocation5 + $0xd0] sm:$0xff]
    %v706 = vld [vmem:[#allocation5 + $0xd8] sm:$0xff]
    %v707 = vld [vmem:[#allocation5 + $0xe0] sm:$0xff]
    %v708 = vld [vmem:[#allocation5 + $0xe8] sm:$0xff]
    %v709 = vld [vmem:[#allocation5 + $0xf0] sm:$0xff]
    %v710 = vld [vmem:[#allocation5 + $0xf8] sm:$0xff]
    %v711 = vld [vmem:[#allocation5 + $0x100] sm:$0xff]
    %v712 = vld [vmem:[#allocation5 + $0x108] sm:$0xff]
    %v713 = vld [vmem:[#allocation5 + $0x110] sm:$0xff]
    %v714 = vld [vmem:[#allocation5 + $0x118] sm:$0xff]
    %v715 = vld [vmem:[#allocation5 + $0x120] sm:$0xff]
    %v716 = vld [vmem:[#allocation5 + $0x128] sm:$0xff]
    %v717 = vld [vmem:[#allocation5 + $0x130] sm:$0xff]
    %v718 = vld [vmem:[#allocation5 + $0x138] sm:$0xff]
    %v719 = vld [vmem:[#allocation5 + $0x140] sm:$0xff]
    %v720 = vld [vmem:[#allocation5 + $0x148] sm:$0xff]
    %v721 = vld [vmem:[#allocation5 + $0x150] sm:$0xff]
    %v722 = vld [vmem:[#allocation5 + $0x158] sm:$0xff]
    %v723 = vld [vmem:[#allocation5 + $0x160] sm:$0xff]
    %v724 = vld [vmem:[#allocation5 + $0x168] sm:$0xff]
    %v725 = vld [vmem:[#allocation5 + $0x170] sm:$0xff]
    %v726 = vld [vmem:[#allocation5 + $0x178] sm:$0xff]
    %v727 = vld [vmem:[#allocation5 + $0x180] sm:$0xff]
    %v728 = vld [vmem:[#allocation5 + $0x188] sm:$0xff]
    %v729 = vld [vmem:[#allocation5 + $0x190] sm:$0xff]
    %v730 = vld [vmem:[#allocation5 + $0x198] sm:$0xff]
    %v731 = vld [vmem:[#allocation5 + $0x1a0] sm:$0xff]
    %v732 = vld [vmem:[#allocation5 + $0x1a8] sm:$0xff]
    %v733 = vld [vmem:[#allocation5 + $0x1b0] sm:$0xff]
    %v734 = vld [vmem:[#allocation5 + $0x1b8] sm:$0xff]
    %v735 = vld [vmem:[#allocation5 + $0x1c0] sm:$0xff]
    %v736 = vld [vmem:[#allocation5 + $0x1c8] sm:$0xff]
    %v737 = vld [vmem:[#allocation5 + $0x1d0] sm:$0xff]
    %v738 = vld [vmem:[#allocation5 + $0x1d8] sm:$0xff]
    %v739 = vld [vmem:[#allocation5 + $0x1e0] sm:$0xff]
    %v740 = vld [vmem:[#allocation5 + $0x1e8] sm:$0xff]
    %v741 = vld [vmem:[#allocation5 + $0x1f0] sm:$0xff]
    %v742 = vld [vmem:[#allocation5 + $0x1f8] sm:$0xff]
    %v743 = vld [vmem:[#allocation5 + $0x200] sm:$0xff]
    %v744 = vld [vmem:[#allocation5 + $0x208] sm:$0xff]
    %v745 = vld [vmem:[#allocation5 + $0x210] sm:$0xff]
    %v746 = vld [vmem:[#allocation5 + $0x218] sm:$0xff]
    %v747 = vld [vmem:[#allocation5 + $0x220] sm:$0xff]
    %v748 = vld [vmem:[#allocation5 + $0x228] sm:$0xff]
    %v749 = vld [vmem:[#allocation5 + $0x230] sm:$0xff]
    %v750 = vld [vmem:[#allocation5 + $0x238] sm:$0xff]
    %v751 = vld [vmem:[#allocation5 + $0x240] sm:$0xff]
    %v752 = vld [vmem:[#allocation5 + $0x248] sm:$0xff]
    %v753 = vld [vmem:[#allocation5 + $0x250] sm:$0xff]
    %v754 = vld [vmem:[#allocation5 + $0x258] sm:$0xff]
    %v755 = vld [vmem:[#allocation5 + $0x260] sm:$0xff]
    %v756 = vld [vmem:[#allocation5 + $0x268] sm:$0xff]
    %v757 = vld [vmem:[#allocation5 + $0x270] sm:$0xff]
    %v758 = vld [vmem:[#allocation5 + $0x278] sm:$0xff]
    %v759 = vld [vmem:[#allocation5 + $0x280] sm:$0xff]
    %v760 = vld [vmem:[#allocation5 + $0x288] sm:$0xff]
    %v761 = vld [vmem:[#allocation5 + $0x290] sm:$0xff]
    %v762 = vld [vmem:[#allocation5 + $0x298] sm:$0xff]
    %v763 = vld [vmem:[#allocation5 + $0x2a0] sm:$0xff]
    %v764 = vld [vmem:[#allocation5 + $0x2a8] sm:$0xff]
    %v765 = vld [vmem:[#allocation5 + $0x2b0] sm:$0xff]
    %v766 = vld [vmem:[#allocation5 + $0x2b8] sm:$0xff]
    %v767 = vld [vmem:[#allocation5 + $0x2c0] sm:$0xff]
    %v768 = vld [vmem:[#allocation5 + $0x2c8] sm:$0xff]
    %v769 = vld [vmem:[#allocation5 + $0x2d0] sm:$0xff]
    %v770 = vld [vmem:[#allocation5 + $0x2d8] sm:$0xff]
    %v771 = vld [vmem:[#allocation5 + $0x2e0] sm:$0xff]
    %v772 = vld [vmem:[#allocation5 + $0x2e8] sm:$0xff]
    %v773 = vld [vmem:[#allocation5 + $0x2f0] sm:$0xff]
    %v774 = vld [vmem:[#allocation5 + $0x2f8] sm:$0xff]
    %v775 = vld [vmem:[#allocation5 + $0x300] sm:$0xff]
    %v776 = vld [vmem:[#allocation5 + $0x308] sm:$0xff]
    %v777 = vld [vmem:[#allocation5 + $0x310] sm:$0xff]
    %v778 = vld [vmem:[#allocation5 + $0x318] sm:$0xff]
    %v779 = vld [vmem:[#allocation5 + $0x320] sm:$0xff]
    %v780 = vld [vmem:[#allocation5 + $0x328] sm:$0xff]
    %v781 = vld [vmem:[#allocation5 + $0x330] sm:$0xff]
    %v782 = vld [vmem:[#allocation5 + $0x338] sm:$0xff]
    %v783 = vld [vmem:[#allocation5 + $0x340] sm:$0xff]
    %v784 = vld [vmem:[#allocation5 + $0x348] sm:$0xff]
    %v785 = vld [vmem:[#allocation5 + $0x350] sm:$0xff]
    %v786 = vld [vmem:[#allocation5 + $0x358] sm:$0xff]
    %v787 = vld [vmem:[#allocation5 + $0x360] sm:$0xff]
    %v788 = vld [vmem:[#allocation5 + $0x368] sm:$0xff]
    %v789 = vld [vmem:[#allocation5 + $0x370] sm:$0xff]
    %v790 = vld [vmem:[#allocation5 + $0x378] sm:$0xff]
    %v791 = vld [vmem:[#allocation5 + $0x380] sm:$0xff]
    %v792 = vld [vmem:[#allocation5 + $0x388] sm:$0xff]
    %v793 = vld [vmem:[#allocation5 + $0x390] sm:$0xff]
    %v794 = vld [vmem:[#allocation5 + $0x398] sm:$0xff]
    %v795 = vld [vmem:[#allocation5 + $0x3a0] sm:$0xff]
    %v796 = vld [vmem:[#allocation5 + $0x3a8] sm:$0xff]
    %v797 = vld [vmem:[#allocation5 + $0x3b0] sm:$0xff]
    %v798 = vld [vmem:[#allocation5 + $0x3b8] sm:$0xff]
    %v799 = vld [vmem:[#allocation5 + $0x3c0] sm:$0xff]
    %v800 = vld [vmem:[#allocation5 + $0x3c8] sm:$0xff]
    %v801 = vld [vmem:[#allocation5 + $0x3d0] sm:$0xff]
    %v802 = vld [vmem:[#allocation5 + $0x3d8] sm:$0xff]
    %v803 = vld [vmem:[#allocation5 + $0x3e0] sm:$0xff]
    %v804 = vld [vmem:[#allocation5 + $0x3e8] sm:$0xff]
    %v805 = vld [vmem:[#allocation5 + $0x3f0] sm:$0xff]
    %v806 = vld [vmem:[#allocation5 + $0x3f8] sm:$0xff]
    %s807 = scalar_lea.vmem [#allocation5], 1024
    %v808 = vld [vmem:[%s807] ss:$8 sm:$0xf]
    %v809 = vld [vmem:[#allocation7] sm:$0xff]
    %v810 = vld [vmem:[#allocation7 + $0x8] sm:$0xff]
    %v811 = vld [vmem:[#allocation7 + $0x10] sm:$0xff]
    %v812 = vld [vmem:[#allocation7 + $0x18] sm:$0xff]
    %v813 = vld [vmem:[#allocation7 + $0x20] sm:$0xff]
    %v814 = vld [vmem:[#allocation7 + $0x28] sm:$0xff]
    %v815 = vld [vmem:[#allocation7 + $0x30] sm:$0xff]
    %v816 = vld [vmem:[#allocation7 + $0x38] sm:$0xff]
    %v817 = vld [vmem:[#allocation7 + $0x40] sm:$0xff]
    %v818 = vld [vmem:[#allocation7 + $0x48] sm:$0xff]
    %v819 = vld [vmem:[#allocation7 + $0x50] sm:$0xff]
    %v820 = vld [vmem:[#allocation7 + $0x58] sm:$0xff]
    %v821 = vld [vmem:[#allocation7 + $0x60] sm:$0xff]
    %v822 = vld [vmem:[#allocation7 + $0x68] sm:$0xff]
    %v823 = vld [vmem:[#allocation7 + $0x70] sm:$0xff]
    %v824 = vld [vmem:[#allocation7 + $0x78] sm:$0xff]
    %v825 = vld [vmem:[#allocation7 + $0x80] sm:$0xff]
    %v826 = vld [vmem:[#allocation7 + $0x88] sm:$0xff]
    %v827 = vld [vmem:[#allocation7 + $0x90] sm:$0xff]
    %v828 = vld [vmem:[#allocation7 + $0x98] sm:$0xff]
    %v829 = vld [vmem:[#allocation7 + $0xa0] sm:$0xff]
    %v830 = vld [vmem:[#allocation7 + $0xa8] sm:$0xff]
    %v831 = vld [vmem:[#allocation7 + $0xb0] sm:$0xff]
    %v832 = vld [vmem:[#allocation7 + $0xb8] sm:$0xff]
    %v833 = vld [vmem:[#allocation7 + $0xc0] sm:$0xff]
    %v834 = vld [vmem:[#allocation7 + $0xc8] sm:$0xff]
    %v835 = vld [vmem:[#allocation7 + $0xd0] sm:$0xff]
    %v836 = vld [vmem:[#allocation7 + $0xd8] sm:$0xff]
    %v837 = vld [vmem:[#allocation7 + $0xe0] sm:$0xff]
    %v838 = vld [vmem:[#allocation7 + $0xe8] sm:$0xff]
    %v839 = vld [vmem:[#allocation7 + $0xf0] sm:$0xff]
    %v840 = vld [vmem:[#allocation7 + $0xf8] sm:$0xff]
    %v841 = vld [vmem:[#allocation7 + $0x100] sm:$0xff]
    %v842 = vld [vmem:[#allocation7 + $0x108] sm:$0xff]
    %v843 = vld [vmem:[#allocation7 + $0x110] sm:$0xff]
    %v844 = vld [vmem:[#allocation7 + $0x118] sm:$0xff]
    %v845 = vld [vmem:[#allocation7 + $0x120] sm:$0xff]
    %v846 = vld [vmem:[#allocation7 + $0x128] sm:$0xff]
    %v847 = vld [vmem:[#allocation7 + $0x130] sm:$0xff]
    %v848 = vld [vmem:[#allocation7 + $0x138] sm:$0xff]
    %v849 = vld [vmem:[#allocation7 + $0x140] sm:$0xff]
    %v850 = vld [vmem:[#allocation7 + $0x148] sm:$0xff]
    %v851 = vld [vmem:[#allocation7 + $0x150] sm:$0xff]
    %v852 = vld [vmem:[#allocation7 + $0x158] sm:$0xff]
    %v853 = vld [vmem:[#allocation7 + $0x160] sm:$0xff]
    %v854 = vld [vmem:[#allocation7 + $0x168] sm:$0xff]
    %v855 = vld [vmem:[#allocation7 + $0x170] sm:$0xff]
    %v856 = vld [vmem:[#allocation7 + $0x178] sm:$0xff]
    %v857 = vld [vmem:[#allocation7 + $0x180] sm:$0xff]
    %v858 = vld [vmem:[#allocation7 + $0x188] sm:$0xff]
    %v859 = vld [vmem:[#allocation7 + $0x190] sm:$0xff]
    %v860 = vld [vmem:[#allocation7 + $0x198] sm:$0xff]
    %v861 = vld [vmem:[#allocation7 + $0x1a0] sm:$0xff]
    %v862 = vld [vmem:[#allocation7 + $0x1a8] sm:$0xff]
    %v863 = vld [vmem:[#allocation7 + $0x1b0] sm:$0xff]
    %v864 = vld [vmem:[#allocation7 + $0x1b8] sm:$0xff]
    %v865 = vld [vmem:[#allocation7 + $0x1c0] sm:$0xff]
    %v866 = vld [vmem:[#allocation7 + $0x1c8] sm:$0xff]
    %v867 = vld [vmem:[#allocation7 + $0x1d0] sm:$0xff]
    %v868 = vld [vmem:[#allocation7 + $0x1d8] sm:$0xff]
    %v869 = vld [vmem:[#allocation7 + $0x1e0] sm:$0xff]
    %v870 = vld [vmem:[#allocation7 + $0x1e8] sm:$0xff]
    %v871 = vld [vmem:[#allocation7 + $0x1f0] sm:$0xff]
    %v872 = vld [vmem:[#allocation7 + $0x1f8] sm:$0xff]
    %v873 = vld [vmem:[#allocation7 + $0x200] sm:$0x1]
    %v875 = vlaneseq
    %v876 = vshrl.u32 %v875, 7
    %v877 = vsub.s32 0, %v876
    %v878 = vrot.slane %v678, %v877
    %v879 = vlaneseq
    %v880 = vshrl.u32 %v879, 7
    %v881 = vsub.s32 1, %v880
    %v882 = vrot.slane %v678, %v881
    %v883 = vlaneseq
    %v884 = vshrl.u32 %v883, 7
    %v885 = vsub.s32 2, %v884
    %v886 = vrot.slane %v678, %v885
    %v887 = vlaneseq
    %v888 = vshrl.u32 %v887, 7
    %v889 = vsub.s32 3, %v888
    %v890 = vrot.slane %v678, %v889
    %895 = vmatprep.subr.mxu0 %v550
    %896 = vmatpush1.msra.mxu0 %v549
    %897 = vmatprep.subr.mxu0 %v554
    %898 = vmatpush1.msra.mxu0 %v553
    %899 = vmatprep.subr.mxu0 %v558
    %900 = vmatpush1.msra.mxu0 %v557
    %901 = vmatprep.subr.mxu0 %v562
    %902 = vmatpush1.msra.mxu0 %v561
    %903 = vmatprep.subr.mxu0 %v566
    %904 = vmatpush1.msra.mxu0 %v565
    %905 = vmatprep.subr.mxu0 %v570
    %906 = vmatpush1.msra.mxu0 %v569
    %907 = vmatprep.subr.mxu0 %v574
    %908 = vmatpush1.msra.mxu0 %v573
    %909 = vmatprep.subr.mxu0 %v578
    %910 = vmatpush1.msra.mxu0 %v577
    %911 = vmatprep.subr.mxu0 %v582
    %912 = vmatpush1.msra.mxu0 %v581
    %913 = vmatprep.subr.mxu0 %v586
    %914 = vmatpush1.msra.mxu0 %v585
    %915 = vmatprep.subr.mxu0 %v590
    %916 = vmatpush1.msra.mxu0 %v589
    %917 = vmatprep.subr.mxu0 %v594
    %918 = vmatpush1.msra.mxu0 %v593
    %919 = vmatprep.subr.mxu0 %v598
    %920 = vmatpush1.msra.mxu0 %v597
    %921 = vmatprep.subr.mxu0 %v602
    %922 = vmatpush1.msra.mxu0 %v601
    %923 = vmatprep.subr.mxu0 %v606
    %924 = vmatpush1.msra.mxu0 %v605
    %925 = vmatprep.subr.mxu0 %v610
    %926 = vmatpush1.msra.mxu0 %v609
    %927 = vmatprep.subr.mxu0 %v614
    %928 = vmatpush1.msra.mxu0 %v613
    %929 = vmatprep.subr.mxu0 %v618
    %930 = vmatpush1.msra.mxu0 %v617
    %931 = vmatprep.subr.mxu0 %v622
    %932 = vmatpush1.msra.mxu0 %v621
    %933 = vmatprep.subr.mxu0 %v626
    %934 = vmatpush1.msra.mxu0 %v625
    %935 = vmatprep.subr.mxu0 %v630
    %936 = vmatpush1.msra.mxu0 %v629
    %937 = vmatprep.subr.mxu0 %v634
    %938 = vmatpush1.msra.mxu0 %v633
    %939 = vmatprep.subr.mxu0 %v638
    %940 = vmatpush1.msra.mxu0 %v637
    %941 = vmatprep.subr.mxu0 %v642
    %942 = vmatpush1.msra.mxu0 %v641
    %943 = vmatprep.subr.mxu0 %v646
    %944 = vmatpush1.msra.mxu0 %v645
    %945 = vmatprep.subr.mxu0 %v650
    %946 = vmatpush1.msra.mxu0 %v649
    %947 = vmatprep.subr.mxu0 %v654
    %948 = vmatpush1.msra.mxu0 %v653
    %949 = vmatprep.subr.mxu0 %v658
    %950 = vmatpush1.msra.mxu0 %v657
    %951 = vmatprep.subr.mxu0 %v662
    %952 = vmatpush1.msra.mxu0 %v661
    %953 = vmatprep.subr.mxu0 %v666
    %954 = vmatpush1.msra.mxu0 %v665
    %955 = vmatprep.subr.mxu0 %v670
    %956 = vmatpush1.msra.mxu0 %v669
    %957 = vmatprep.subr.mxu0 %v674
    %958 = vmatpush1.msra.mxu0 %v673
    %959 = vmatprep.mubr.f32.mxu0 %v540
    %960 = vmatmul.mubr.f32.gmra.mrb[0].mxu0 %v539
    %v961 = vpop.f32.mrb[0].mxu0
    %v962 = vadd.f32 %v878, %v961
    %v963 = vpop.f32.mrb[0].mxu0
    %v964 = vadd.f32 %v882, %v963
    %965 = vmatprep.mubr.f32.mxu0 %v542
    %966 = vmatmul.mubr.f32.gmra.mrb[0].mxu0 %v541
    %v967 = vpop.f32.mrb[0].mxu0
    %v968 = vadd.f32 %v878, %v967
    %v969 = vpop.f32.mrb[0].mxu0
    %v970 = vadd.f32 %v882, %v969
    %971 = vmatprep.mubr.f32.mxu0 %v544
    %972 = vmatmul.mubr.f32.gmra.mrb[0].mxu0 %v543
    %v973 = vpop.f32.mrb[0].mxu0
    %v974 = vadd.f32 %v878, %v973
    %v975 = vpop.f32.mrb[0].mxu0
    %v976 = vadd.f32 %v882, %v975
    %977 = vmatprep.mubr.f32.mxu0 %v546
    %978 = vmatmul.mubr.f32.gmra.mrb[0].mxu0 %v545
    %v979 = vpop.f32.mrb[0].mxu0
    %v980 = vadd.f32 %v878, %v979
    %v981 = vpop.f32.mrb[0].mxu0
    %v982 = vadd.f32 %v882, %v981
    %983 = vmatprep.mubr.f32.mxu0 %v548
    %984 = vmatmul.mubr.f32.gmra.mrb[0].mxu0 %v547
    %v985 = vpop.f32.mrb[0].mxu0
    %v986 = vadd.f32 %v878, %v985
    %v987 = vpop.f32.mrb[0].mxu0
    %v988 = vadd.f32 %v882, %v987
    %989 = vdwg.mxu0
    %990 = vmatprep.subr.mxu0 %v552
    %991 = vmatpush1.msra.mxu0 %v551
    %992 = vmatprep.subr.mxu0 %v556
    %993 = vmatpush1.msra.mxu0 %v555
    %994 = vmatprep.subr.mxu0 %v560
    %995 = vmatpush1.msra.mxu0 %v559
    %996 = vmatprep.subr.mxu0 %v564
    %997 = vmatpush1.msra.mxu0 %v563
    %998 = vmatprep.subr.mxu0 %v568
    %999 = vmatpush1.msra.mxu0 %v567
    %1000 = vmatprep.subr.mxu0 %v572
    %1001 = vmatpush1.msra.mxu0 %v571
    %1002 = vmatprep.subr.mxu0 %v576
    %1003 = vmatpush1.msra.mxu0 %v575
    %1004 = vmatprep.subr.mxu0 %v580
    %1005 = vmatpush1.msra.mxu0 %v579
    %1006 = vmatprep.subr.mxu0 %v584
    %1007 = vmatpush1.msra.mxu0 %v583
    %1008 = vmatprep.subr.mxu0 %v588
    %1009 = vmatpush1.msra.mxu0 %v587
    %1010 = vmatprep.subr.mxu0 %v592
    %1011 = vmatpush1.msra.mxu0 %v591
    %1012 = vmatprep.subr.mxu0 %v596
    %1013 = vmatpush1.msra.mxu0 %v595
    %1014 = vmatprep.subr.mxu0 %v600
    %1015 = vmatpush1.msra.mxu0 %v599
    %1016 = vmatprep.subr.mxu0 %v604
    %1017 = vmatpush1.msra.mxu0 %v603
    %1018 = vmatprep.subr.mxu0 %v608
    %1019 = vmatpush1.msra.mxu0 %v607
    %1020 = vmatprep.subr.mxu0 %v612
    %1021 = vmatpush1.msra.mxu0 %v611
    %1022 = vmatprep.subr.mxu0 %v616
    %1023 = vmatpush1.msra.mxu0 %v615
    %1024 = vmatprep.subr.mxu0 %v620
    %1025 = vmatpush1.msra.mxu0 %v619
    %1026 = vmatprep.subr.mxu0 %v624
    %1027 = vmatpush1.msra.mxu0 %v623
    %1028 = vmatprep.subr.mxu0 %v628
    %1029 = vmatpush1.msra.mxu0 %v627
    %1030 = vmatprep.subr.mxu0 %v632
    %1031 = vmatpush1.msra.mxu0 %v631
    %1032 = vmatprep.subr.mxu0 %v636
    %1033 = vmatpush1.msra.mxu0 %v635
    %1034 = vmatprep.subr.mxu0 %v640
    %1035 = vmatpush1.msra.mxu0 %v639
    %1036 = vmatprep.subr.mxu0 %v644
    %1037 = vmatpush1.msra.mxu0 %v643
    %1038 = vmatprep.subr.mxu0 %v648
    %1039 = vmatpush1.msra.mxu0 %v647
    %1040 = vmatprep.subr.mxu0 %v652
    %1041 = vmatpush1.msra.mxu0 %v651
    %1042 = vmatprep.subr.mxu0 %v656
    %1043 = vmatpush1.msra.mxu0 %v655
    %1044 = vmatprep.subr.mxu0 %v660
    %1045 = vmatpush1.msra.mxu0 %v659
    %1046 = vmatprep.subr.mxu0 %v664
    %1047 = vmatpush1.msra.mxu0 %v663
    %1048 = vmatprep.subr.mxu0 %v668
    %1049 = vmatpush1.msra.mxu0 %v667
    %1050 = vmatprep.subr.mxu0 %v672
    %1051 = vmatpush1.msra.mxu0 %v671
    %1052 = vmatprep.subr.mxu0 %v676
    %1053 = vmatpush1.msra.mxu0 %v675
    %1054 = vmatprep.mubr.f32.mxu0 %v540
    %1055 = vmatmul.mubr.f32.gmra.mrb[0].mxu0 %v539
    %v1056 = vpop.f32.mrb[0].mxu0
    %v1057 = vadd.f32 %v886, %v1056
    %v1058 = vpop.f32.mrb[0].mxu0
    %v1059 = vadd.f32 %v890, %v1058
    %1060 = vmatprep.mubr.f32.mxu0 %v542
    %1061 = vmatmul.mubr.f32.gmra.mrb[0].mxu0 %v541
    %v1062 = vpop.f32.mrb[0].mxu0
    %v1063 = vadd.f32 %v886, %v1062
    %v1064 = vpop.f32.mrb[0].mxu0
    %v1065 = vadd.f32 %v890, %v1064
    %1066 = vmatprep.mubr.f32.mxu0 %v544
    %1067 = vmatmul.mubr.f32.gmra.mrb[0].mxu0 %v543
    %v1068 = vpop.f32.mrb[0].mxu0
    %v1069 = vadd.f32 %v886, %v1068
    %v1070 = vpop.f32.mrb[0].mxu0
    %v1071 = vadd.f32 %v890, %v1070
    %1072 = vmatprep.mubr.f32.mxu0 %v546
    %1073 = vmatmul.mubr.f32.gmra.mrb[0].mxu0 %v545
    %v1074 = vpop.f32.mrb[0].mxu0
    %v1075 = vadd.f32 %v886, %v1074
    %v1076 = vpop.f32.mrb[0].mxu0
    %v1077 = vadd.f32 %v890, %v1076
    %1078 = vmatprep.mubr.f32.mxu0 %v548
    %1079 = vmatmul.mubr.f32.gmra.mrb[0].mxu0 %v547
    %v1080 = vpop.f32.mrb[0].mxu0
    %v1081 = vadd.f32 %v886, %v1080
    %v1082 = vpop.f32.mrb[0].mxu0
    %v1083 = vadd.f32 %v890, %v1082
    %1084 = vdwg.mxu0
    %v1085 = vxor.u32 %v962, 2147483648
    %v1086 = vxor.u32 %v964, 2147483648
    %v1087 = vxor.u32 %v1057, 2147483648
    %v1088 = vxor.u32 %v1059, 2147483648
    %v1089 = vxor.u32 %v968, 2147483648
    %v1090 = vxor.u32 %v970, 2147483648
    %v1091 = vxor.u32 %v1063, 2147483648
    %v1092 = vxor.u32 %v1065, 2147483648
    %v1093 = vxor.u32 %v974, 2147483648
    %v1094 = vxor.u32 %v976, 2147483648
    %v1095 = vxor.u32 %v1069, 2147483648
    %v1096 = vxor.u32 %v1071, 2147483648
    %v1097 = vxor.u32 %v980, 2147483648
    %v1098 = vxor.u32 %v982, 2147483648
    %v1099 = vxor.u32 %v1075, 2147483648
    %v1100 = vxor.u32 %v1077, 2147483648
    %v1101 = vxor.u32 %v986, 2147483648
    %v1102 = vxor.u32 %v988, 2147483648
    %v1103 = vxor.u32 %v1081, 2147483648
    %v1104 = vxor.u32 %v1083, 2147483648
    %v1105 = vmul.f32 %v1085, 1.442695
    %v1106 = vpow.pop %v1105
    %v1107 = vmul.f32 %v1086, 1.442695
    %v1108 = vpow.pop %v1107
    %v1109 = vmul.f32 %v1087, 1.442695
    %v1110 = vpow.pop %v1109
    %v1111 = vmul.f32 %v1088, 1.442695
    %v1112 = vpow.pop %v1111
    %v1113 = vmul.f32 %v1089, 1.442695
    %v1114 = vpow.pop %v1113
    %v1115 = vmul.f32 %v1090, 1.442695
    %v1116 = vpow.pop %v1115
    %v1117 = vmul.f32 %v1091, 1.442695
    %v1118 = vpow.pop %v1117
    %v1119 = vmul.f32 %v1092, 1.442695
    %v1120 = vpow.pop %v1119
    %v1121 = vmul.f32 %v1093, 1.442695
    %v1122 = vpow.pop %v1121
    %v1123 = vmul.f32 %v1094, 1.442695
    %v1124 = vpow.pop %v1123
    %v1125 = vmul.f32 %v1095, 1.442695
    %v1126 = vpow.pop %v1125
    %v1127 = vmul.f32 %v1096, 1.442695
    %v1128 = vpow.pop %v1127
    %v1129 = vmul.f32 %v1097, 1.442695
    %v1130 = vpow.pop %v1129
    %v1131 = vmul.f32 %v1098, 1.442695
    %v1132 = vpow.pop %v1131
    %v1133 = vmul.f32 %v1099, 1.442695
    %v1134 = vpow.pop %v1133
    %v1135 = vmul.f32 %v1100, 1.442695
    %v1136 = vpow.pop %v1135
    %v1137 = vmul.f32 %v1101, 1.442695
    %v1138 = vpow.pop %v1137
    %v1139 = vmul.f32 %v1102, 1.442695
    %v1140 = vpow.pop %v1139
    %v1141 = vmul.f32 %v1103, 1.442695
    %v1142 = vpow.pop %v1141
    %v1143 = vmul.f32 %v1104, 1.442695
    %v1144 = vpow.pop %v1143
    %v1145 = vadd.f32 %v1106, 1.0
    %v1146 = vadd.f32 %v1108, 1.0
    %v1147 = vadd.f32 %v1110, 1.0
    %v1148 = vadd.f32 %v1112, 1.0
    %v1149 = vadd.f32 %v1114, 1.0
    %v1150 = vadd.f32 %v1116, 1.0
    %v1151 = vadd.f32 %v1118, 1.0
    %v1152 = vadd.f32 %v1120, 1.0
    %v1153 = vadd.f32 %v1122, 1.0
    %v1154 = vadd.f32 %v1124, 1.0
    %v1155 = vadd.f32 %v1126, 1.0
    %v1156 = vadd.f32 %v1128, 1.0
    %v1157 = vadd.f32 %v1130, 1.0
    %v1158 = vadd.f32 %v1132, 1.0
    %v1159 = vadd.f32 %v1134, 1.0
    %v1160 = vadd.f32 %v1136, 1.0
    %v1161 = vadd.f32 %v1138, 1.0
    %v1162 = vadd.f32 %v1140, 1.0
    %v1163 = vadd.f32 %v1142, 1.0
    %v1164 = vadd.f32 %v1144, 1.0
    %v1165 = vrcp.pop %v1145
    %v1166 = vmul.f32 1.0, %v1165
    %v1167 = vrcp.pop %v1146
    %v1168 = vmul.f32 1.0, %v1167
    %v1169 = vrcp.pop %v1147
    %v1170 = vmul.f32 1.0, %v1169
    %v1171 = vrcp.pop %v1148
    %v1172 = vmul.f32 1.0, %v1171
    %v1173 = vrcp.pop %v1149
    %v1174 = vmul.f32 1.0, %v1173
    %v1175 = vrcp.pop %v1150
    %v1176 = vmul.f32 1.0, %v1175
    %v1177 = vrcp.pop %v1151
    %v1178 = vmul.f32 1.0, %v1177
    %v1179 = vrcp.pop %v1152
    %v1180 = vmul.f32 1.0, %v1179
    %v1181 = vrcp.pop %v1153
    %v1182 = vmul.f32 1.0, %v1181
    %v1183 = vrcp.pop %v1154
    %v1184 = vmul.f32 1.0, %v1183
    %v1185 = vrcp.pop %v1155
    %v1186 = vmul.f32 1.0, %v1185
    %v1187 = vrcp.pop %v1156
    %v1188 = vmul.f32 1.0, %v1187
    %v1189 = vrcp.pop %v1157
    %v1190 = vmul.f32 1.0, %v1189
    %v1191 = vrcp.pop %v1158
    %v1192 = vmul.f32 1.0, %v1191
    %v1193 = vrcp.pop %v1159
    %v1194 = vmul.f32 1.0, %v1193
    %v1195 = vrcp.pop %v1160
    %v1196 = vmul.f32 1.0, %v1195
    %v1197 = vrcp.pop %v1161
    %v1198 = vmul.f32 1.0, %v1197
    %v1199 = vrcp.pop %v1162
    %v1200 = vmul.f32 1.0, %v1199
    %v1201 = vrcp.pop %v1163
    %v1202 = vmul.f32 1.0, %v1201
    %v1203 = vrcp.pop %v1164
    %v1204 = vmul.f32 1.0, %v1203
    %v1205 = vmul.f32 %v962, %v1166
    %v1206 = vmul.f32 %v964, %v1168
    %v1207 = vmul.f32 %v1057, %v1170
    %v1208 = vmul.f32 %v1059, %v1172
    %v1209 = vmul.f32 %v968, %v1174
    %v1210 = vmul.f32 %v970, %v1176
    %v1211 = vmul.f32 %v1063, %v1178
    %v1212 = vmul.f32 %v1065, %v1180
    %v1213 = vmul.f32 %v974, %v1182
    %v1214 = vmul.f32 %v976, %v1184
    %v1215 = vmul.f32 %v1069, %v1186
    %v1216 = vmul.f32 %v1071, %v1188
    %v1217 = vmul.f32 %v980, %v1190
    %v1218 = vmul.f32 %v982, %v1192
    %v1219 = vmul.f32 %v1075, %v1194
    %v1220 = vmul.f32 %v1077, %v1196
    %v1221 = vmul.f32 %v986, %v1198
    %v1222 = vmul.f32 %v988, %v1200
    %v1223 = vmul.f32 %v1081, %v1202
    %v1224 = vmul.f32 %v1083, %v1204
    %v1226 = vlaneseq
    %v1227 = vshrl.u32 %v1226, 7
    %v1228 = vsub.s32 0, %v1227
    %v1229 = vrot.slane %v808, %v1228
    %v1230 = vlaneseq
    %v1231 = vshrl.u32 %v1230, 7
    %v1232 = vsub.s32 1, %v1231
    %v1233 = vrot.slane %v808, %v1232
    %v1234 = vlaneseq
    %v1235 = vshrl.u32 %v1234, 7
    %v1236 = vsub.s32 2, %v1235
    %v1237 = vrot.slane %v808, %v1236
    %v1238 = vlaneseq
    %v1239 = vshrl.u32 %v1238, 7
    %v1240 = vsub.s32 3, %v1239
    %v1241 = vrot.slane %v808, %v1240
    %1246 = vmatprep.subr.mxu0 %v680
    %1247 = vmatpush1.msra.mxu0 %v679
    %1248 = vmatprep.subr.mxu0 %v684
    %1249 = vmatpush1.msra.mxu0 %v683
    %1250 = vmatprep.subr.mxu0 %v688
    %1251 = vmatpush1.msra.mxu0 %v687
    %1252 = vmatprep.subr.mxu0 %v692
    %1253 = vmatpush1.msra.mxu0 %v691
    %1254 = vmatprep.subr.mxu0 %v696
    %1255 = vmatpush1.msra.mxu0 %v695
    %1256 = vmatprep.subr.mxu0 %v700
    %1257 = vmatpush1.msra.mxu0 %v699
    %1258 = vmatprep.subr.mxu0 %v704
    %1259 = vmatpush1.msra.mxu0 %v703
    %1260 = vmatprep.subr.mxu0 %v708
    %1261 = vmatpush1.msra.mxu0 %v707
    %1262 = vmatprep.subr.mxu0 %v712
    %1263 = vmatpush1.msra.mxu0 %v711
    %1264 = vmatprep.subr.mxu0 %v716
    %1265 = vmatpush1.msra.mxu0 %v715
    %1266 = vmatprep.subr.mxu0 %v720
    %1267 = vmatpush1.msra.mxu0 %v719
    %1268 = vmatprep.subr.mxu0 %v724
    %1269 = vmatpush1.msra.mxu0 %v723
    %1270 = vmatprep.subr.mxu0 %v728
    %1271 = vmatpush1.msra.mxu0 %v727
    %1272 = vmatprep.subr.mxu0 %v732
    %1273 = vmatpush1.msra.mxu0 %v731
    %1274 = vmatprep.subr.mxu0 %v736
    %1275 = vmatpush1.msra.mxu0 %v735
    %1276 = vmatprep.subr.mxu0 %v740
    %1277 = vmatpush1.msra.mxu0 %v739
    %1278 = vmatprep.subr.mxu0 %v744
    %1279 = vmatpush1.msra.mxu0 %v743
    %1280 = vmatprep.subr.mxu0 %v748
    %1281 = vmatpush1.msra.mxu0 %v747
    %1282 = vmatprep.subr.mxu0 %v752
    %1283 = vmatpush1.msra.mxu0 %v751
    %1284 = vmatprep.subr.mxu0 %v756
    %1285 = vmatpush1.msra.mxu0 %v755
    %1286 = vmatprep.subr.mxu0 %v760
    %1287 = vmatpush1.msra.mxu0 %v759
    %1288 = vmatprep.subr.mxu0 %v764
    %1289 = vmatpush1.msra.mxu0 %v763
    %1290 = vmatprep.subr.mxu0 %v768
    %1291 = vmatpush1.msra.mxu0 %v767
    %1292 = vmatprep.subr.mxu0 %v772
    %1293 = vmatpush1.msra.mxu0 %v771
    %1294 = vmatprep.subr.mxu0 %v776
    %1295 = vmatpush1.msra.mxu0 %v775
    %1296 = vmatprep.subr.mxu0 %v780
    %1297 = vmatpush1.msra.mxu0 %v779
    %1298 = vmatprep.subr.mxu0 %v784
    %1299 = vmatpush1.msra.mxu0 %v783
    %1300 = vmatprep.subr.mxu0 %v788
    %1301 = vmatpush1.msra.mxu0 %v787
    %1302 = vmatprep.subr.mxu0 %v792
    %1303 = vmatpush1.msra.mxu0 %v791
    %1304 = vmatprep.subr.mxu0 %v796
    %1305 = vmatpush1.msra.mxu0 %v795
    %1306 = vmatprep.subr.mxu0 %v800
    %1307 = vmatpush1.msra.mxu0 %v799
    %1308 = vmatprep.subr.mxu0 %v804
    %1309 = vmatpush1.msra.mxu0 %v803
    %1310 = vmatprep.mubr.f32.mxu0 %v301
    %1311 = vmatmul.mubr.f32.gmra.mrb[0].mxu0 %v300
    %v1312 = vpop.f32.mrb[0].mxu0
    %v1313 = vadd.f32 %v1229, %v1312
    %v1314 = vpop.f32.mrb[0].mxu0
    %v1315 = vadd.f32 %v1233, %v1314
    %1316 = vmatprep.mubr.f32.mxu0 %v303
    %1317 = vmatmul.mubr.f32.gmra.mrb[0].mxu0 %v302
    %v1318 = vpop.f32.mrb[0].mxu0
    %v1319 = vadd.f32 %v1229, %v1318
    %v1320 = vpop.f32.mrb[0].mxu0
    %v1321 = vadd.f32 %v1233, %v1320
    %1322 = vmatprep.mubr.f32.mxu0 %v426
    %1323 = vmatmul.mubr.f32.gmra.mrb[0].mxu0 %v425
    %v1324 = vpop.f32.mrb[0].mxu0
    %v1325 = vadd.f32 %v1229, %v1324
    %v1326 = vpop.f32.mrb[0].mxu0
    %v1327 = vadd.f32 %v1233, %v1326
    %1328 = vmatprep.mubr.f32.mxu0 %v414
    %1329 = vmatmul.mubr.f32.gmra.mrb[0].mxu0 %v412
    %v1330 = vpop.f32.mrb[0].mxu0
    %v1331 = vadd.f32 %v1229, %v1330
    %v1332 = vpop.f32.mrb[0].mxu0
    %v1333 = vadd.f32 %v1233, %v1332
    %1334 = vmatprep.mubr.f32.mxu0 %v418
    %1335 = vmatmul.mubr.f32.gmra.mrb[0].mxu0 %v416
    %v1336 = vpop.f32.mrb[0].mxu0
    %v1337 = vadd.f32 %v1229, %v1336
    %v1338 = vpop.f32.mrb[0].mxu0
    %v1339 = vadd.f32 %v1233, %v1338
    %1340 = vdwg.mxu0
    %1341 = vmatprep.subr.mxu0 %v682
    %1342 = vmatpush1.msra.mxu0 %v681
    %1343 = vmatprep.subr.mxu0 %v686
    %1344 = vmatpush1.msra.mxu0 %v685
    %1345 = vmatprep.subr.mxu0 %v690
    %1346 = vmatpush1.msra.mxu0 %v689
    %1347 = vmatprep.subr.mxu0 %v694
    %1348 = vmatpush1.msra.mxu0 %v693
    %1349 = vmatprep.subr.mxu0 %v698
    %1350 = vmatpush1.msra.mxu0 %v697
    %1351 = vmatprep.subr.mxu0 %v702
    %1352 = vmatpush1.msra.mxu0 %v701
    %1353 = vmatprep.subr.mxu0 %v706
    %1354 = vmatpush1.msra.mxu0 %v705
    %1355 = vmatprep.subr.mxu0 %v710
    %1356 = vmatpush1.msra.mxu0 %v709
    %1357 = vmatprep.subr.mxu0 %v714
    %1358 = vmatpush1.msra.mxu0 %v713
    %1359 = vmatprep.subr.mxu0 %v718
    %1360 = vmatpush1.msra.mxu0 %v717
    %1361 = vmatprep.subr.mxu0 %v722
    %1362 = vmatpush1.msra.mxu0 %v721
    %1363 = vmatprep.subr.mxu0 %v726
    %1364 = vmatpush1.msra.mxu0 %v725
    %1365 = vmatprep.subr.mxu0 %v730
    %1366 = vmatpush1.msra.mxu0 %v729
    %1367 = vmatprep.subr.mxu0 %v734
    %1368 = vmatpush1.msra.mxu0 %v733
    %1369 = vmatprep.subr.mxu0 %v738
    %1370 = vmatpush1.msra.mxu0 %v737
    %1371 = vmatprep.subr.mxu0 %v742
    %1372 = vmatpush1.msra.mxu0 %v741
    %1373 = vmatprep.subr.mxu0 %v746
    %1374 = vmatpush1.msra.mxu0 %v745
    %1375 = vmatprep.subr.mxu0 %v750
    %1376 = vmatpush1.msra.mxu0 %v749
    %1377 = vmatprep.subr.mxu0 %v754
    %1378 = vmatpush1.msra.mxu0 %v753
    %1379 = vmatprep.subr.mxu0 %v758
    %1380 = vmatpush1.msra.mxu0 %v757
    %1381 = vmatprep.subr.mxu0 %v762
    %1382 = vmatpush1.msra.mxu0 %v761
    %1383 = vmatprep.subr.mxu0 %v766
    %1384 = vmatpush1.msra.mxu0 %v765
    %1385 = vmatprep.subr.mxu0 %v770
    %1386 = vmatpush1.msra.mxu0 %v769
    %1387 = vmatprep.subr.mxu0 %v774
    %1388 = vmatpush1.msra.mxu0 %v773
    %1389 = vmatprep.subr.mxu0 %v778
    %1390 = vmatpush1.msra.mxu0 %v777
    %1391 = vmatprep.subr.mxu0 %v782
    %1392 = vmatpush1.msra.mxu0 %v781
    %1393 = vmatprep.subr.mxu0 %v786
    %1394 = vmatpush1.msra.mxu0 %v785
    %1395 = vmatprep.subr.mxu0 %v790
    %1396 = vmatpush1.msra.mxu0 %v789
    %1397 = vmatprep.subr.mxu0 %v794
    %1398 = vmatpush1.msra.mxu0 %v793
    %1399 = vmatprep.subr.mxu0 %v798
    %1400 = vmatpush1.msra.mxu0 %v797
    %1401 = vmatprep.subr.mxu0 %v802
    %1402 = vmatpush1.msra.mxu0 %v801
    %1403 = vmatprep.subr.mxu0 %v806
    %1404 = vmatpush1.msra.mxu0 %v805
    %1405 = vmatprep.mubr.f32.mxu0 %v301
    %1406 = vmatmul.mubr.f32.gmra.mrb[0].mxu0 %v300
    %v1407 = vpop.f32.mrb[0].mxu0
    %v1408 = vadd.f32 %v1237, %v1407
    %v1409 = vpop.f32.mrb[0].mxu0
    %v1410 = vadd.f32 %v1241, %v1409
    %1411 = vmatprep.mubr.f32.mxu0 %v303
    %1412 = vmatmul.mubr.f32.gmra.mrb[0].mxu0 %v302
    %v1413 = vpop.f32.mrb[0].mxu0
    %v1414 = vadd.f32 %v1237, %v1413
    %v1415 = vpop.f32.mrb[0].mxu0
    %v1416 = vadd.f32 %v1241, %v1415
    %1417 = vmatprep.mubr.f32.mxu0 %v426
    %1418 = vmatmul.mubr.f32.gmra.mrb[0].mxu0 %v425
    %v1419 = vpop.f32.mrb[0].mxu0
    %v1420 = vadd.f32 %v1237, %v1419
    %v1421 = vpop.f32.mrb[0].mxu0
    %v1422 = vadd.f32 %v1241, %v1421
    %1423 = vmatprep.mubr.f32.mxu0 %v414
    %1424 = vmatmul.mubr.f32.gmra.mrb[0].mxu0 %v412
    %v1425 = vpop.f32.mrb[0].mxu0
    %v1426 = vadd.f32 %v1237, %v1425
    %v1427 = vpop.f32.mrb[0].mxu0
    %v1428 = vadd.f32 %v1241, %v1427
    %1429 = vmatprep.mubr.f32.mxu0 %v418
    %1430 = vmatmul.mubr.f32.gmra.mrb[0].mxu0 %v416
    %v1431 = vpop.f32.mrb[0].mxu0
    %v1432 = vadd.f32 %v1237, %v1431
    %v1433 = vpop.f32.mrb[0].mxu0
    %v1434 = vadd.f32 %v1241, %v1433
    %1435 = vdwg.mxu0
    %v1436 = vadd.f32 %v1205, %v1313
    %v1437 = vadd.f32 %v1206, %v1315
    %v1438 = vadd.f32 %v1207, %v1408
    %v1439 = vadd.f32 %v1208, %v1410
    %v1440 = vadd.f32 %v1209, %v1319
    %v1441 = vadd.f32 %v1210, %v1321
    %v1442 = vadd.f32 %v1211, %v1414
    %v1443 = vadd.f32 %v1212, %v1416
    %v1444 = vadd.f32 %v1213, %v1325
    %v1445 = vadd.f32 %v1214, %v1327
    %v1446 = vadd.f32 %v1215, %v1420
    %v1447 = vadd.f32 %v1216, %v1422
    %v1448 = vadd.f32 %v1217, %v1331
    %v1449 = vadd.f32 %v1218, %v1333
    %v1450 = vadd.f32 %v1219, %v1426
    %v1451 = vadd.f32 %v1220, %v1428
    %v1452 = vadd.f32 %v1221, %v1337
    %v1453 = vadd.f32 %v1222, %v1339
    %v1454 = vadd.f32 %v1223, %v1432
    %v1455 = vadd.f32 %v1224, %v1434
    %v1456 = vlaneseq
    %v1457 = vshrl.u32 %v1456, 7
    %v1458 = vsub.s32 0, %v1457
    %v1459 = vrot.slane %v873, %v1458
    %1460 = vmatprep.subr.mxu0 0.0
    %1461 = vmatpush1.msra.mxu0 %v809
    %1462 = vmatprep.subr.mxu0 0.0
    %1463 = vmatpush1.msra.mxu0 %v810
    %1464 = vmatprep.subr.mxu0 0.0
    %1465 = vmatpush1.msra.mxu0 %v811
    %1466 = vmatprep.subr.mxu0 0.0
    %1467 = vmatpush1.msra.mxu0 %v812
    %1468 = vmatprep.subr.mxu0 0.0
    %1469 = vmatpush1.msra.mxu0 %v813
    %1470 = vmatprep.subr.mxu0 0.0
    %1471 = vmatpush1.msra.mxu0 %v814
    %1472 = vmatprep.subr.mxu0 0.0
    %1473 = vmatpush1.msra.mxu0 %v815
    %1474 = vmatprep.subr.mxu0 0.0
    %1475 = vmatpush1.msra.mxu0 %v816
    %1476 = vmatprep.subr.mxu0 0.0
    %1477 = vmatpush1.msra.mxu0 %v817
    %1478 = vmatprep.subr.mxu0 0.0
    %1479 = vmatpush1.msra.mxu0 %v818
    %1480 = vmatprep.subr.mxu0 0.0
    %1481 = vmatpush1.msra.mxu0 %v819
    %1482 = vmatprep.subr.mxu0 0.0
    %1483 = vmatpush1.msra.mxu0 %v820
    %1484 = vmatprep.subr.mxu0 0.0
    %1485 = vmatpush1.msra.mxu0 %v821
    %1486 = vmatprep.subr.mxu0 0.0
    %1487 = vmatpush1.msra.mxu0 %v822
    %1488 = vmatprep.subr.mxu0 0.0
    %1489 = vmatpush1.msra.mxu0 %v823
    %1490 = vmatprep.subr.mxu0 0.0
    %1491 = vmatpush1.msra.mxu0 %v824
    %1492 = vmatprep.subr.mxu0 0.0
    %1493 = vmatpush1.msra.mxu0 %v825
    %1494 = vmatprep.subr.mxu0 0.0
    %1495 = vmatpush1.msra.mxu0 %v826
    %1496 = vmatprep.subr.mxu0 0.0
    %1497 = vmatpush1.msra.mxu0 %v827
    %1498 = vmatprep.subr.mxu0 0.0
    %1499 = vmatpush1.msra.mxu0 %v828
    %1500 = vmatprep.subr.mxu0 0.0
    %1501 = vmatpush1.msra.mxu0 %v829
    %1502 = vmatprep.subr.mxu0 0.0
    %1503 = vmatpush1.msra.mxu0 %v830
    %1504 = vmatprep.subr.mxu0 0.0
    %1505 = vmatpush1.msra.mxu0 %v831
    %1506 = vmatprep.subr.mxu0 0.0
    %1507 = vmatpush1.msra.mxu0 %v832
    %1508 = vmatprep.subr.mxu0 0.0
    %1509 = vmatpush1.msra.mxu0 %v833
    %1510 = vmatprep.subr.mxu0 0.0
    %1511 = vmatpush1.msra.mxu0 %v834
    %1512 = vmatprep.subr.mxu0 0.0
    %1513 = vmatpush1.msra.mxu0 %v835
    %1514 = vmatprep.subr.mxu0 0.0
    %1515 = vmatpush1.msra.mxu0 %v836
    %1516 = vmatprep.subr.mxu0 0.0
    %1517 = vmatpush1.msra.mxu0 %v837
    %1518 = vmatprep.subr.mxu0 0.0
    %1519 = vmatpush1.msra.mxu0 %v838
    %1520 = vmatprep.subr.mxu0 0.0
    %1521 = vmatpush1.msra.mxu0 %v839
    %1522 = vmatprep.subr.mxu0 0.0
    %1523 = vmatpush1.msra.mxu0 %v840
    %1524 = vmatprep.mubr.f32.mxu0 %v1437
    %1525 = vmatmul.mubr.f32.gmra.mrb[0].mxu0 %v1436
    %v1526 = vpop.f32.mrb[0].mxu0
    %v1527 = vadd.f32 %v1459, %v1526
    %v1528 = vpop.f32.mrb[0].mxu0
    %1529 = vmatprep.mubr.f32.mxu0 %v1441
    %1530 = vmatmul.mubr.f32.gmra.mrb[0].mxu0 %v1440
    %v1531 = vpop.f32.mrb[0].mxu0
    %v1532 = vadd.f32 %v1459, %v1531
    %v1533 = vpop.f32.mrb[0].mxu0
    %1534 = vmatprep.mubr.f32.mxu0 %v1445
    %1535 = vmatmul.mubr.f32.gmra.mrb[0].mxu0 %v1444
    %v1536 = vpop.f32.mrb[0].mxu0
    %v1537 = vadd.f32 %v1459, %v1536
    %v1538 = vpop.f32.mrb[0].mxu0
    %1539 = vmatprep.mubr.f32.mxu0 %v1449
    %1540 = vmatmul.mubr.f32.gmra.mrb[0].mxu0 %v1448
    %v1541 = vpop.f32.mrb[0].mxu0
    %v1542 = vadd.f32 %v1459, %v1541
    %v1543 = vpop.f32.mrb[0].mxu0
    %1544 = vmatprep.mubr.f32.mxu0 %v1453
    %1545 = vmatmul.mubr.f32.gmra.mrb[0].mxu0 %v1452
    %v1546 = vpop.f32.mrb[0].mxu0
    %v1547 = vadd.f32 %v1459, %v1546
    %v1548 = vpop.f32.mrb[0].mxu0
    %1549 = vdwg.mxu0
    %1550 = vmatprep.subr.mxu0 0.0
    %1551 = vmatpush1.msra.mxu0 %v841
    %1552 = vmatprep.subr.mxu0 0.0
    %1553 = vmatpush1.msra.mxu0 %v842
    %1554 = vmatprep.subr.mxu0 0.0
    %1555 = vmatpush1.msra.mxu0 %v843
    %1556 = vmatprep.subr.mxu0 0.0
    %1557 = vmatpush1.msra.mxu0 %v844
    %1558 = vmatprep.subr.mxu0 0.0
    %1559 = vmatpush1.msra.mxu0 %v845
    %1560 = vmatprep.subr.mxu0 0.0
    %1561 = vmatpush1.msra.mxu0 %v846
    %1562 = vmatprep.subr.mxu0 0.0
    %1563 = vmatpush1.msra.mxu0 %v847
    %1564 = vmatprep.subr.mxu0 0.0
    %1565 = vmatpush1.msra.mxu0 %v848
    %1566 = vmatprep.subr.mxu0 0.0
    %1567 = vmatpush1.msra.mxu0 %v849
    %1568 = vmatprep.subr.mxu0 0.0
    %1569 = vmatpush1.msra.mxu0 %v850
    %1570 = vmatprep.subr.mxu0 0.0
    %1571 = vmatpush1.msra.mxu0 %v851
    %1572 = vmatprep.subr.mxu0 0.0
    %1573 = vmatpush1.msra.mxu0 %v852
    %1574 = vmatprep.subr.mxu0 0.0
    %1575 = vmatpush1.msra.mxu0 %v853
    %1576 = vmatprep.subr.mxu0 0.0
    %1577 = vmatpush1.msra.mxu0 %v854
    %1578 = vmatprep.subr.mxu0 0.0
    %1579 = vmatpush1.msra.mxu0 %v855
    %1580 = vmatprep.subr.mxu0 0.0
    %1581 = vmatpush1.msra.mxu0 %v856
    %1582 = vmatprep.subr.mxu0 0.0
    %1583 = vmatpush1.msra.mxu0 %v857
    %1584 = vmatprep.subr.mxu0 0.0
    %1585 = vmatpush1.msra.mxu0 %v858
    %1586 = vmatprep.subr.mxu0 0.0
    %1587 = vmatpush1.msra.mxu0 %v859
    %1588 = vmatprep.subr.mxu0 0.0
    %1589 = vmatpush1.msra.mxu0 %v860
    %1590 = vmatprep.subr.mxu0 0.0
    %1591 = vmatpush1.msra.mxu0 %v861
    %1592 = vmatprep.subr.mxu0 0.0
    %1593 = vmatpush1.msra.mxu0 %v862
    %1594 = vmatprep.subr.mxu0 0.0
    %1595 = vmatpush1.msra.mxu0 %v863
    %1596 = vmatprep.subr.mxu0 0.0
    %1597 = vmatpush1.msra.mxu0 %v864
    %1598 = vmatprep.subr.mxu0 0.0
    %1599 = vmatpush1.msra.mxu0 %v865
    %1600 = vmatprep.subr.mxu0 0.0
    %1601 = vmatpush1.msra.mxu0 %v866
    %1602 = vmatprep.subr.mxu0 0.0
    %1603 = vmatpush1.msra.mxu0 %v867
    %1604 = vmatprep.subr.mxu0 0.0
    %1605 = vmatpush1.msra.mxu0 %v868
    %1606 = vmatprep.subr.mxu0 0.0
    %1607 = vmatpush1.msra.mxu0 %v869
    %1608 = vmatprep.subr.mxu0 0.0
    %1609 = vmatpush1.msra.mxu0 %v870
    %1610 = vmatprep.subr.mxu0 0.0
    %1611 = vmatpush1.msra.mxu0 %v871
    %1612 = vmatprep.subr.mxu0 0.0
    %1613 = vmatpush1.msra.mxu0 %v872
    %1614 = vmatprep.mubr.f32.mxu0 %v1439
    %1615 = vmatmul.mubr.f32.gmra.mrb[0].mxu0 %v1438
    %v1616 = vpop.f32.mrb[0].mxu0
    %v1617 = vadd.f32 %v1527, %v1616
    %v1618 = vpop.f32.mrb[0].mxu0
    %1619 = vmatprep.mubr.f32.mxu0 %v1443
    %1620 = vmatmul.mubr.f32.gmra.mrb[0].mxu0 %v1442
    %v1621 = vpop.f32.mrb[0].mxu0
    %v1622 = vadd.f32 %v1532, %v1621
    %v1623 = vpop.f32.mrb[0].mxu0
    %1624 = vmatprep.mubr.f32.mxu0 %v1447
    %1625 = vmatmul.mubr.f32.gmra.mrb[0].mxu0 %v1446
    %v1626 = vpop.f32.mrb[0].mxu0
    %v1627 = vadd.f32 %v1537, %v1626
    %v1628 = vpop.f32.mrb[0].mxu0
    %1629 = vmatprep.mubr.f32.mxu0 %v1451
    %1630 = vmatmul.mubr.f32.gmra.mrb[0].mxu0 %v1450
    %v1631 = vpop.f32.mrb[0].mxu0
    %v1632 = vadd.f32 %v1542, %v1631
    %v1633 = vpop.f32.mrb[0].mxu0
    %1634 = vmatprep.mubr.f32.mxu0 %v1455
    %1635 = vmatmul.mubr.f32.gmra.mrb[0].mxu0 %v1454
    %v1636 = vpop.f32.mrb[0].mxu0
    %v1637 = vadd.f32 %v1547, %v1636
    %v1638 = vpop.f32.mrb[0].mxu0
    %1639 = vdwg.mxu0
    %1640 = vst [vmem:[#allocation8] sm:$0xff] %v1617
    %1641 = vst [vmem:[#allocation8 + $0x8] sm:$0xff] %v1622
    %1642 = vst [vmem:[#allocation8 + $0x10] sm:$0xff] %v1627
    %1643 = vst [vmem:[#allocation8 + $0x18] sm:$0xff] %v1632
    %1644 = vst [vmem:[#allocation8 + $0x20] sm:$0xff] %v1637
    // Predicated region
    $region42: #{tpu_custom_call.1} parent=1 // pred_check
      _
    $region43: #{tpu_custom_call.1} parent=1 // pred_check_branch
      %1646 = sbr.rel (0) target = $region45
    $region44: #{tpu_custom_call.1} parent=1 // pred_region
      %s1648 = ssub.s32 640, 640
      %1649 = vsyncadd [#allocation4], %s1648
      %s1650 = sshll.u32 [#allocation8], 4
      %s1651 = int_to_ptr.vmem [resolvable:$true] %s1650
      %1656 = dma.vmem_to_hbm [thread:$0]  %s1651, 640, %s7, [#allocation4], 128, 128, 8
    $region45: #{tpu_custom_call.1} parent=1 // pred_fallthru
      _
    // Predicated region
    $region46: #{tpu_custom_call.1} parent=1 // pred_check
      _
    $region47: #{tpu_custom_call.1} parent=1 // pred_check_branch
      %1658 = sbr.rel (0) target = $region49
    $region48: #{tpu_custom_call.1} parent=1 // pred_region
      %1659 = dma.done [#allocation4], 640
    $region49: #{tpu_custom_call.1} parent=1 // pred_fallthru
      _
    %1660 = vsyncpa [#allocation3], 1
    %1661 = vsyncpa [#allocation6], 1
    %1662 = vsyncpa [#allocation4], 1

</llo_original>
